<compile_context>
chip_gen: v7x
topology: tpu7x:2x2x1
jax: 0.10.0
libtpu: 0.0.40
codegen_flags: <defaults>
</compile_context>

<pallas_src>
import numpy as np
import jax
import jax.numpy as jnp
from jax import lax
from jax.experimental import pallas as pl
from jax.experimental.pallas import tpu as pltpu

# ---------------- small synthetic configuration (consistent with module asserts) --------
INPUT_LENGTH = 128
INPUT_DEPTH = 4
NUM_TASKS = 3
NUM_STRANDS = 2
NUM_DIL_LAYERS = 3
DIL_FILTER_SIZES = (5, 3, 3)
DIL_DILATIONS = (1, 2, 4)
DIL_DEPTHS = (32, 32, 32)          # uniform depth (skip-sum is well defined)
PROF_CONV_KERNEL = 9
SHARE_CONTROLS = True

C = DIL_DEPTHS[-1]
TS = NUM_TASKS * NUM_STRANDS                                            # 6
TS_PAD = 8                                                              # padded head width
PADS = tuple(d * (k - 1) // 2 for k, d in zip(DIL_FILTER_SIZES, DIL_DILATIONS))   # (2,2,4)
MAXPAD = max(PADS[1:])                            # in-kernel margin; layer 0 padded in XLA
LPAD = INPUT_LENGTH + 2 * MAXPAD                                        # 136
LAST_DIL = INPUT_LENGTH - sum(d * (k - 1) for k, d in zip(DIL_FILTER_SIZES, DIL_DILATIONS))
PROFILE_LENGTH = LAST_DIL - (PROF_CONV_KERNEL - 1)                      # 104
CUT_START = (INPUT_LENGTH - LAST_DIL) // 2                              # 8
K0 = DIL_FILTER_SIZES[0] * INPUT_DEPTH                                  # 20
K0P = 32                                          # conv0 im2col rows padded for bf16 tiling

KERNEL_WEIGHT_ORDER = (
    "dil_wt0", "dil_b0", "dil_wt1", "dil_b1", "dil_wt2", "dil_b2",
    "prof_wt", "prof_bt", "one_prof_wct", "dense_wt",
)


# ------------------------------- Pallas kernel ------------------------------------------
def _bpnet_kernel(x0_ref, cont_ref, cctrl_ref,
                  w0_ref, b0_ref, w1_ref, b1_ref, w2_ref, b2_ref,
                  wp_ref, bp_ref, wpc_ref, wd_ref,
                  prof_out_ref, cnt_out_ref, sum_buf):
    BBLK = x0_ref.shape[0]
    L = INPUT_LENGTH

    # Zero the pad margins of the skip-sum scratch every step so each grid step is fully
    # independent (safe when the "parallel" batch axis is sharded across TensorCores).
    zmargin = jnp.zeros((BBLK, C, MAXPAD), jnp.float32)
    sum_buf[:, :, 0:MAXPAD] = zmargin
    sum_buf[:, :, MAXPAD + L:LPAD] = zmargin

    dil_wb = ((w1_ref, b1_ref), (w2_ref, b2_ref))

    for b in range(BBLK):
        # ---- dilated conv layer 0: pre-packed im2col -> one MXU matmul -----------------
        y0 = jnp.dot(w0_ref[...], x0_ref[b], preferred_element_type=jnp.float32)
        out = jnp.maximum(y0 + b0_ref[...], 0.0)                     # (C, L) f32
        sum_buf[b, :, MAXPAD:MAXPAD + L] = out                       # dil_conv_sum = out0

        # ---- dilated conv layers 1.. with additive skip accumulation -------------------
        for i in range(1, NUM_DIL_LAYERS):
            k, dil, pad = DIL_FILTER_SIZES[i], DIL_DILATIONS[i], PADS[i]
            off = MAXPAD - pad
            taps = [sum_buf[b, :, off + t * dil: off + t * dil + L].astype(jnp.bfloat16)
                    for t in range(k)]
            xk = jnp.concatenate(taps, axis=0)                       # (k*C, L) sublane stack
            w_ref, bi_ref = dil_wb[i - 1]
            y = jnp.dot(w_ref[...], xk, preferred_element_type=jnp.float32)
            out = jnp.maximum(y + bi_ref[...], 0.0)                  # (C, L) f32
            if i != NUM_DIL_LAYERS - 1:
                sum_buf[b, :, MAXPAD:MAXPAD + L] = (
                    sum_buf[b, :, MAXPAD:MAXPAD + L] + out)

        # ---- center crop of the last dilated conv output -------------------------------
        cut = out[:, CUT_START:CUT_START + LAST_DIL]                 # (C, LAST_DIL) f32
        cut_bf = cut.astype(jnp.bfloat16)

        # ---- profile head (already lane-dense / transposed) ----------------------------
        #   prof^T = sum_t Wp_t^T @ cut[:, t:t+O]  +  Wc^T @ cont^T  +  b
        acc = jnp.dot(wpc_ref[...], cont_ref[b],
                      preferred_element_type=jnp.float32)            # (TS_PAD, O)
        for t in range(PROF_CONV_KERNEL):
            acc = acc + jnp.dot(wp_ref[t], cut_bf[:, t:t + PROFILE_LENGTH],
                                preferred_element_type=jnp.float32)
        prof_out_ref[b] = acc + bp_ref[...]                          # (TS_PAD, O)

        # ---- counts head: mean-pool folded into a lane-dense matmul + lane reduce ------
        cm = jnp.dot(wd_ref[...], cut_bf, preferred_element_type=jnp.float32)  # (TS_PAD, LAST_DIL)
        cnt = jnp.sum(cm, axis=1, keepdims=True) * (1.0 / LAST_DIL)             # (TS_PAD, 1)
        cnt_out_ref[b] = cnt + cctrl_ref[b]


# ------------------------------- wrapper ------------------------------------------------
def profile_predictor_forward(input_seqs, cont_profs, kparams, block_batch=8):
    """input_seqs: (B, I, D); cont_profs: (B, 1 or T, O, S).  Returns
    (prof_pred (B, T, O, S), count_pred (B, T, S))."""
    B = input_seqs.shape[0]
    # choose the block so the batch grid has >= 2 steps whenever B >= 2 (v7x: 2 TCs)
    BBLK = int(max(1, min(block_batch, -(-B // 2))))
    nb = -(-B // BBLK)
    B_pad = nb * BBLK
    f32 = jnp.float32

    # glue: controls to channel-major / length-last layout (channel index = t*S + s)
    cp = jnp.transpose(cont_profs.astype(f32), (0, 1, 3, 2))         # (B, T', S, O)
    if SHARE_CONTROLS:
        cp = jnp.tile(cp, (1, NUM_TASKS, 1, 1))                      # (B, T, S, O)
    cont_cs = cp.reshape(B, TS, PROFILE_LENGTH)

    # glue: counts-head control term precomputed in XLA (tiny, unpadded)
    cont_counts = jnp.sum(cont_cs, axis=2)                           # (B, TS)
    cctrl = cont_counts @ kparams["cnt_wcc"] + kparams["cnt_bias"]   # (B, TS)
    cctrl = jnp.pad(cctrl, ((0, B_pad - B), (0, TS_PAD - TS)))[..., None]   # (B_pad, 8, 1)

    # glue: conv0 im2col pre-pack (taps*channels on sublanes, length on lanes)
    xT = jnp.transpose(input_seqs.astype(f32), (0, 2, 1))            # (B, D, I)
    xTp = jnp.pad(xT, ((0, 0), (0, 0), (PADS[0], PADS[0])))
    taps0 = [xTp[:, :, t:t + INPUT_LENGTH] for t in range(DIL_FILTER_SIZES[0])]
    x0 = jnp.concatenate(taps0, axis=1)                              # (B, K0, L)
    x0 = jnp.pad(x0, ((0, B_pad - B), (0, K0P - K0), (0, 0))).astype(jnp.bfloat16)

    cont_k = jnp.pad(cont_cs, ((0, B_pad - B), (0, TS_PAD - TS), (0, 0))
                     ).astype(jnp.bfloat16)                          # (B_pad, 8, O)

    in_arrays = [x0, cont_k, cctrl]
    in_specs = [
        pl.BlockSpec((BBLK, K0P, INPUT_LENGTH), lambda b: (b, 0, 0)),
        pl.BlockSpec((BBLK, TS_PAD, PROFILE_LENGTH), lambda b: (b, 0, 0)),
        pl.BlockSpec((BBLK, TS_PAD, 1), lambda b: (b, 0, 0)),
    ]
    for name in KERNEL_WEIGHT_ORDER:
        w = kparams[name]
        in_arrays.append(w)
        in_specs.append(pl.BlockSpec(w.shape, lambda b, _nd=w.ndim: (0,) * _nd))

    out_shapes = (
        jax.ShapeDtypeStruct((B_pad, TS_PAD, PROFILE_LENGTH), jnp.float32),
        jax.ShapeDtypeStruct((B_pad, TS_PAD, 1), jnp.float32),
    )
    out_specs = [
        pl.BlockSpec((BBLK, TS_PAD, PROFILE_LENGTH), lambda b: (b, 0, 0)),
        pl.BlockSpec((BBLK, TS_PAD, 1), lambda b: (b, 0, 0)),
    ]

    prof_t, cnt = pl.pallas_call(
        _bpnet_kernel,
        out_shape=out_shapes,
        grid_spec=pltpu.PrefetchScalarGridSpec(
            num_scalar_prefetch=0,
            grid=(nb,),
            in_specs=in_specs,
            out_specs=out_specs,
            scratch_shapes=[pltpu.VMEM((BBLK, C, LPAD), jnp.float32)]),
        compiler_params=pltpu.CompilerParams(
            dimension_semantics=("parallel",),
            vmem_limit_bytes=32 * 1024 * 1024),
    )(*in_arrays)

    # glue: unpack lane-dense outputs back to (B, T, O, S) / (B, T, S)
    prof = prof_t[:B, :TS, :]                                        # (B, T*S, O)
    prof_pred = jnp.transpose(
        prof.reshape(B, NUM_TASKS, NUM_STRANDS, PROFILE_LENGTH), (0, 1, 3, 2))
    count_pred = cnt[:B, :TS, 0].reshape(B, NUM_TASKS, NUM_STRANDS)
    return prof_pred, count_pred


# ------------------------------- parameters ---------------------------------------------
def _split_grouped_1x1(W):
    """W: (T*S, 2S) PyTorch-style grouped 1x1 conv weight (kernel dim squeezed).
    Returns block-diagonal (T*S, T*S) matrices Wp (predicted inputs) and Wc (control
    inputs) such that y = x_pred @ Wp + x_cont @ Wc (channel index t*S + s)."""
    S = NUM_STRANDS
    Wp = jnp.zeros((TS, TS), jnp.float32)
    Wc = jnp.zeros((TS, TS), jnp.float32)
    for t in range(NUM_TASKS):
        blk = W[t * S:(t + 1) * S, :]                 # (S, 2S): rows = output strand
        Wp = Wp.at[t * S:(t + 1) * S, t * S:(t + 1) * S].set(blk[:, :S].T)
        Wc = Wc.at[t * S:(t + 1) * S, t * S:(t + 1) * S].set(blk[:, S:].T)
    return Wp, Wc


def init_params(key):
    """Raw, PyTorch-equivalent parameters (used by the pure-JAX reference)."""
    params = {}
    keys = iter(jax.random.split(key, 32))
    in_ch = INPUT_DEPTH
    for i in range(NUM_DIL_LAYERS):
        k, out_ch = DIL_FILTER_SIZES[i], DIL_DEPTHS[i]
        scale = 1.0 / np.sqrt(k * in_ch)
        params[f"dil_w{i}"] = jax.random.normal(next(keys), (k, in_ch, out_ch), jnp.float32) * scale
        params[f"dil_b{i}"] = jax.random.normal(next(keys), (1, out_ch), jnp.float32) * 0.1
        in_ch = out_ch
    params["prof_w"] = jax.random.normal(next(keys), (PROF_CONV_KERNEL, C, TS), jnp.float32) \
        * (1.0 / np.sqrt(PROF_CONV_KERNEL * C))
    params["prof_b"] = jax.random.normal(next(keys), (1, TS), jnp.float32) * 0.1
    params["dense_w"] = jax.random.normal(next(keys), (C, TS), jnp.float32) * (1.0 / np.sqrt(C))
    params["dense_b"] = jax.random.normal(next(keys), (1, TS), jnp.float32) * 0.1
    params["raw_one_prof_w"] = jax.random.normal(next(keys), (TS, 2 * NUM_STRANDS), jnp.float32) * 0.3
    params["raw_one_prof_b"] = jax.random.normal(next(keys), (TS,), jnp.float32) * 0.1
    params["raw_one_cnt_w"] = jax.random.normal(next(keys), (TS, 2 * NUM_STRANDS), jnp.float32) * 0.3
    params["raw_one_cnt_b"] = jax.random.normal(next(keys), (TS,), jnp.float32) * 0.1
    return params


def prepare_kernel_params(params):
    """Flip conv weights into the weight-left (C_out, k*C_in) layout, fold the grouped
    1x1 convs' predicted-strand halves into the preceding layers, and pre-cast all
    matmul operands to bf16 (biases and wrapper-side terms stay f32)."""
    bf16 = jnp.bfloat16
    kp = {}
    in_ch = INPUT_DEPTH
    for i in range(NUM_DIL_LAYERS):
        k, out_ch = DIL_FILTER_SIZES[i], DIL_DEPTHS[i]
        wt = params[f"dil_w{i}"].reshape(k * in_ch, out_ch).T        # (C_out, k*C_in)
        if i == 0:
            wt = jnp.pad(wt, ((0, 0), (0, K0P - K0)))                # pad 20 -> 32
        kp[f"dil_wt{i}"] = wt.astype(bf16)
        kp[f"dil_b{i}"] = params[f"dil_b{i}"].reshape(out_ch, 1)     # (C_out, 1) f32
        in_ch = out_ch

    w1p, w1c = _split_grouped_1x1(params["raw_one_prof_w"])
    wcp, wcc = _split_grouped_1x1(params["raw_one_cnt_w"])

    # profile head: fold predicted-half 1x1 into the 9-tap conv; store per-tap transposed
    wpf = params["prof_w"].reshape(PROF_CONV_KERNEL * C, TS) @ w1p   # (9*C, TS)
    wpfT = jnp.transpose(wpf.reshape(PROF_CONV_KERNEL, C, TS), (0, 2, 1))   # (9, TS, C)
    kp["prof_wt"] = jnp.pad(wpfT, ((0, 0), (0, TS_PAD - TS), (0, 0))).astype(bf16)
    bpf = params["prof_b"].reshape(1, TS) @ w1p + params["raw_one_prof_b"][None, :]
    kp["prof_bt"] = jnp.pad(bpf.T, ((0, TS_PAD - TS), (0, 0)))       # (TS_PAD, 1) f32
    kp["one_prof_wct"] = jnp.pad(w1c.T, ((0, TS_PAD - TS), (0, TS_PAD - TS))).astype(bf16)

    # counts head: fold predicted-half 1x1 into the dense layer; transpose
    wdf = params["dense_w"] @ wcp                                    # (C, TS)
    kp["dense_wt"] = jnp.pad(wdf.T, ((0, TS_PAD - TS), (0, 0))).astype(bf16)   # (TS_PAD, C)
    # control half of the counts head is evaluated in the XLA wrapper
    kp["cnt_wcc"] = wcc                                              # (TS, TS) f32
    kp["cnt_bias"] = (params["dense_b"].reshape(1, TS) @ wcp
                      + params["raw_one_cnt_b"][None, :])            # (1, TS) f32
    return kp


# ------------------------------- pure-JAX reference -------------------------------------
def _grouped_one_conv_ref(x, W, b):
    S = NUM_STRANDS
    outs = []
    for t in range(NUM_TASKS):
        xg = x[:, t * 2 * S:(t + 1) * 2 * S, :]
        Wg = W[t * S:(t + 1) * S, :]
        outs.append(jnp.einsum("bil,oi->bol", xg, Wg)
                    + b[t * S:(t + 1) * S][None, :, None])
    return jnp.concatenate(outs, axis=1)


def ref_forward(input_seqs, cont_profs, params):
    B = input_seqs.shape[0]
    x = jnp.transpose(input_seqs, (0, 2, 1))                         # (B, D, L)  NCL
    cp = jnp.transpose(cont_profs, (0, 1, 3, 2))                     # (B, T', S, O)
    cc = jnp.sum(cp, axis=3)
    if SHARE_CONTROLS:
        cp = jnp.tile(cp, (1, NUM_TASKS, 1, 1))
        cc = jnp.tile(cc, (1, NUM_TASKS, 1))
    dsum = 0.0
    out = None
    for i in range(NUM_DIL_LAYERS):
        w = jnp.transpose(params[f"dil_w{i}"], (2, 1, 0))            # (O, I, K)
        b = params[f"dil_b{i}"][0]
        inp = x if i == 0 else dsum
        conv = lax.conv_general_dilated(
            inp, w, window_strides=(1,), padding=[(PADS[i], PADS[i])],
            rhs_dilation=(DIL_DILATIONS[i],),
            dimension_numbers=("NCH", "OIH", "NCH"))
        out = jnp.maximum(conv + b[None, :, None], 0.0)
        if i != NUM_DIL_LAYERS - 1:
            dsum = out + dsum
    cut = out[:, :, CUT_START:CUT_START + LAST_DIL]
    wp = jnp.transpose(params["prof_w"], (2, 1, 0))
    plc = lax.conv_general_dilated(cut, wp, (1,), "VALID",
                                   dimension_numbers=("NCH", "OIH", "NCH"))
    plc = plc + params["prof_b"][0][None, :, None]
    plc = plc.reshape(B, NUM_TASKS, NUM_STRANDS, PROFILE_LENGTH)
    pwc = jnp.concatenate([plc, cp], axis=2).reshape(B, NUM_TASKS * 2 * NUM_STRANDS, PROFILE_LENGTH)
    one = _grouped_one_conv_ref(pwc, params["raw_one_prof_w"], params["raw_one_prof_b"])
    prof_pred = jnp.transpose(one.reshape(B, NUM_TASKS, NUM_STRANDS, PROFILE_LENGTH), (0, 1, 3, 2))

    pooled = jnp.mean(cut, axis=2)
    dense = pooled @ params["dense_w"] + params["dense_b"][0]
    dense = dense.reshape(B, NUM_TASKS, NUM_STRANDS)
    cwc = jnp.concatenate([dense, cc], axis=2).reshape(B, NUM_TASKS * 2 * NUM_STRANDS, 1)
    cone = _grouped_one_conv_ref(cwc, params["raw_one_cnt_w"], params["raw_one_cnt_b"])
    count_pred = cone.reshape(B, NUM_TASKS, NUM_STRANDS)
    return prof_pred, count_pred


# ------------------------------- main ----------------------------------------------------
if __name__ == "__main__":
    key = jax.random.PRNGKey(0)
    kx, kc, kprm = jax.random.split(key, 3)
    params = init_params(kprm)
    kparams = prepare_kernel_params(params)

    B = 2
    input_seqs = jax.random.normal(kx, (B, INPUT_LENGTH, INPUT_DEPTH), jnp.float32)
    cont_profs = jax.random.uniform(kc, (B, 1, PROFILE_LENGTH, NUM_STRANDS),
                                    jnp.float32, 0.0, 5.0)

    fwd = jax.jit(lambda x, c: profile_predictor_forward(x, c, kparams))
    prof_pred, count_pred = fwd(input_seqs, cont_profs)
    jax.block_until_ready((prof_pred, count_pred))

    assert prof_pred.shape == (B, NUM_TASKS, PROFILE_LENGTH, NUM_STRANDS)
    assert count_pred.shape == (B, NUM_TASKS, NUM_STRANDS)

    ref_prof, ref_cnt = ref_forward(input_seqs, cont_profs, params)
    # bf16 MXU operands (per the perf review) -> compare against the f32 reference at a
    # bf16-appropriate tolerance; all accumulation / elementwise work remains f32.
    np.testing.assert_allclose(np.asarray(prof_pred), np.asarray(ref_prof),
                               rtol=5e-2, atol=5e-2)
    np.testing.assert_allclose(np.asarray(count_pred), np.asarray(ref_cnt),
                               rtol=5e-2, atol=5e-2)

    print("KERNEL_OK")
</pallas_src>

<mosaic_0001>
module attributes {stable_mosaic.version = 11 : i64} {
  func.func @_bpnet_kernel(%arg0: i32, %arg1: memref<1x32x128xbf16, #tpu.memory_space<vmem>>, %arg2: memref<1x8x104xbf16, #tpu.memory_space<vmem>>, %arg3: memref<1x8x1xf32, #tpu.memory_space<vmem>>, %arg4: memref<32x32xbf16, #tpu.memory_space<vmem>>, %arg5: memref<32x1xf32, #tpu.memory_space<vmem>>, %arg6: memref<32x96xbf16, #tpu.memory_space<vmem>>, %arg7: memref<32x1xf32, #tpu.memory_space<vmem>>, %arg8: memref<32x96xbf16, #tpu.memory_space<vmem>>, %arg9: memref<32x1xf32, #tpu.memory_space<vmem>>, %arg10: memref<9x8x32xbf16, #tpu.memory_space<vmem>>, %arg11: memref<8x1xf32, #tpu.memory_space<vmem>>, %arg12: memref<8x8xbf16, #tpu.memory_space<vmem>>, %arg13: memref<8x32xbf16, #tpu.memory_space<vmem>>, %arg14: memref<1x8x104xf32, #tpu.memory_space<vmem>>, %arg15: memref<1x8x1xf32, #tpu.memory_space<vmem>>, %arg16: memref<1x32x136xf32, #tpu.memory_space<vmem>>) attributes {dimension_semantics = [#tpu.dimension_semantics<parallel>], iteration_bounds = array<i64: 2>, scalar_prefetch = 0 : i64, scratch_operands = 1 : i64, tpu.core_type = #tpu.core_type<tc>, window_params = [{transform_indices = @transform_0, window_bounds = array<i64: 1, 32, 128>}, {transform_indices = @transform_1, window_bounds = array<i64: 1, 8, 104>}, {transform_indices = @transform_2, window_bounds = array<i64: 1, 8, 1>}, {pipeline_mode = #tpu.pipeline_mode<synchronous>, transform_indices = @transform_3, window_bounds = array<i64: 32, 32>}, {pipeline_mode = #tpu.pipeline_mode<synchronous>, transform_indices = @transform_4, window_bounds = array<i64: 32, 1>}, {pipeline_mode = #tpu.pipeline_mode<synchronous>, transform_indices = @transform_5, window_bounds = array<i64: 32, 96>}, {pipeline_mode = #tpu.pipeline_mode<synchronous>, transform_indices = @transform_6, window_bounds = array<i64: 32, 1>}, {pipeline_mode = #tpu.pipeline_mode<synchronous>, transform_indices = @transform_7, window_bounds = array<i64: 32, 96>}, {pipeline_mode = #tpu.pipeline_mode<synchronous>, transform_indices = @transform_8, window_bounds = array<i64: 32, 1>}, {pipeline_mode = #tpu.pipeline_mode<synchronous>, transform_indices = @transform_9, window_bounds = array<i64: 9, 8, 32>}, {pipeline_mode = #tpu.pipeline_mode<synchronous>, transform_indices = @transform_10, window_bounds = array<i64: 8, 1>}, {pipeline_mode = #tpu.pipeline_mode<synchronous>, transform_indices = @transform_11, window_bounds = array<i64: 8, 8>}, {pipeline_mode = #tpu.pipeline_mode<synchronous>, transform_indices = @transform_12, window_bounds = array<i64: 8, 32>}, {transform_indices = @transform_13, window_bounds = array<i64: 1, 8, 104>}, {transform_indices = @transform_14, window_bounds = array<i64: 1, 8, 1>}]} {
    %cst = arith.constant 0.000000e+00 : f32
    %0 = vector.broadcast %cst : f32 to vector<1x32x4xf32>
    %c0 = arith.constant 0 : index
    %c0_0 = arith.constant 0 : index
    %c0_1 = arith.constant 0 : index
    %1 = vector.load %arg16[%c0, %c0_0, %c0_1] : memref<1x32x136xf32, #tpu.memory_space<vmem>>, vector<1x32x4xf32>
    tpu.vector_store %arg16[%c0, %c0_0, %c0_1], %0 {strides = array<i32>} : memref<1x32x136xf32, #tpu.memory_space<vmem>>, vector<1x32x4xf32>,
    %c0_2 = arith.constant 0 : index
    %c0_3 = arith.constant 0 : index
    %c132 = arith.constant 132 : index
    %2 = vector.load %arg16[%c0_2, %c0_3, %c132] : memref<1x32x136xf32, #tpu.memory_space<vmem>>, vector<1x32x4xf32>
    tpu.vector_store %arg16[%c0_2, %c0_3, %c132], %0 {strides = array<i32>} : memref<1x32x136xf32, #tpu.memory_space<vmem>>, vector<1x32x4xf32>,
    %c0_4 = arith.constant 0 : index
    %c0_5 = arith.constant 0 : index
    %3 = vector.load %arg4[%c0_4, %c0_5] : memref<32x32xbf16, #tpu.memory_space<vmem>>, vector<32x32xbf16>
    %c0_6 = arith.constant 0 : index
    %c0_7 = arith.constant 0 : index
    %c0_8 = arith.constant 0 : index
    %4 = vector.load %arg1[%c0_6, %c0_7, %c0_8] : memref<1x32x128xbf16, #tpu.memory_space<vmem>>, vector<1x32x128xbf16>
    %5 = vector.shape_cast %4 : vector<1x32x128xbf16> to vector<32x128xbf16>
    %cst_9 = arith.constant dense<0.000000e+00> : vector<32x128xf32>
    %6 = tpu.matmul %3, %5, %cst_9 {dimension_numbers = #tpu.dot_dimension_numbers<[1], [0], [0], [1], [0, 0, 1, 1], [], []>} : vector<32x32xbf16>, vector<32x128xbf16>, vector<32x128xf32> -> vector<32x128xf32>
    %c0_10 = arith.constant 0 : index
    %c0_11 = arith.constant 0 : index
    %7 = vector.load %arg5[%c0_10, %c0_11] : memref<32x1xf32, #tpu.memory_space<vmem>>, vector<32x1xf32>
    %8 = vector.broadcast %7 : vector<32x1xf32> to vector<32x128xf32>
    %9 = arith.addf %6, %8 : vector<32x128xf32>
    %cst_12 = arith.constant 0.000000e+00 : f32
    %10 = vector.broadcast %cst_12 : f32 to vector<32x128xf32>
    %11 = arith.maximumf %9, %10 : vector<32x128xf32>
    %c0_13 = arith.constant 0 : index
    %c0_14 = arith.constant 0 : index
    %c4 = arith.constant 4 : index
    %12 = vector.load %arg16[%c0_13, %c0_14, %c4] : memref<1x32x136xf32, #tpu.memory_space<vmem>>, vector<1x32x128xf32>
    %13 = vector.shape_cast %12 : vector<1x32x128xf32> to vector<32x128xf32>
    %14 = vector.shape_cast %11 : vector<32x128xf32> to vector<1x32x128xf32>
    tpu.vector_store %arg16[%c0_13, %c0_14, %c4], %14 {strides = array<i32>} : memref<1x32x136xf32, #tpu.memory_space<vmem>>, vector<1x32x128xf32>,
    %c0_15 = arith.constant 0 : index
    %c0_16 = arith.constant 0 : index
    %c2 = arith.constant 2 : index
    %15 = vector.load %arg16[%c0_15, %c0_16, %c2] : memref<1x32x136xf32, #tpu.memory_space<vmem>>, vector<1x32x128xf32>
    %16 = vector.shape_cast %15 : vector<1x32x128xf32> to vector<32x128xf32>
    %17 = arith.truncf %16 : vector<32x128xf32> to vector<32x128xbf16>
    %c0_17 = arith.constant 0 : index
    %c0_18 = arith.constant 0 : index
    %c4_19 = arith.constant 4 : index
    %18 = vector.load %arg16[%c0_17, %c0_18, %c4_19] : memref<1x32x136xf32, #tpu.memory_space<vmem>>, vector<1x32x128xf32>
    %19 = vector.shape_cast %18 : vector<1x32x128xf32> to vector<32x128xf32>
    %20 = arith.truncf %19 : vector<32x128xf32> to vector<32x128xbf16>
    %c0_20 = arith.constant 0 : index
    %c0_21 = arith.constant 0 : index
    %c6 = arith.constant 6 : index
    %21 = vector.load %arg16[%c0_20, %c0_21, %c6] : memref<1x32x136xf32, #tpu.memory_space<vmem>>, vector<1x32x128xf32>
    %22 = vector.shape_cast %21 : vector<1x32x128xf32> to vector<32x128xf32>
    %23 = arith.truncf %22 : vector<32x128xf32> to vector<32x128xbf16>
    %24 = tpu.concatenate %17, %20, %23 in 0 : vector<32x128xbf16>, vector<32x128xbf16>, vector<32x128xbf16> -> vector<96x128xbf16>
    %c0_22 = arith.constant 0 : index
    %c0_23 = arith.constant 0 : index
    %25 = vector.load %arg6[%c0_22, %c0_23] : memref<32x96xbf16, #tpu.memory_space<vmem>>, vector<32x96xbf16>
    %cst_24 = arith.constant dense<0.000000e+00> : vector<32x128xf32>
    %26 = tpu.matmul %25, %24, %cst_24 {dimension_numbers = #tpu.dot_dimension_numbers<[1], [0], [0], [1], [0, 0, 1, 1], [], []>} : vector<32x96xbf16>, vector<96x128xbf16>, vector<32x128xf32> -> vector<32x128xf32>
    %c0_25 = arith.constant 0 : index
    %c0_26 = arith.constant 0 : index
    %27 = vector.load %arg7[%c0_25, %c0_26] : memref<32x1xf32, #tpu.memory_space<vmem>>, vector<32x1xf32>
    %28 = vector.broadcast %27 : vector<32x1xf32> to vector<32x128xf32>
    %29 = arith.addf %26, %28 : vector<32x128xf32>
    %cst_27 = arith.constant 0.000000e+00 : f32
    %30 = vector.broadcast %cst_27 : f32 to vector<32x128xf32>
    %31 = arith.maximumf %29, %30 : vector<32x128xf32>
    %c0_28 = arith.constant 0 : index
    %c0_29 = arith.constant 0 : index
    %c4_30 = arith.constant 4 : index
    %32 = vector.load %arg16[%c0_28, %c0_29, %c4_30] : memref<1x32x136xf32, #tpu.memory_space<vmem>>, vector<1x32x128xf32>
    %33 = vector.shape_cast %32 : vector<1x32x128xf32> to vector<32x128xf32>
    %34 = arith.addf %33, %31 : vector<32x128xf32>
    %c0_31 = arith.constant 0 : index
    %c0_32 = arith.constant 0 : index
    %c4_33 = arith.constant 4 : index
    %35 = vector.load %arg16[%c0_31, %c0_32, %c4_33] : memref<1x32x136xf32, #tpu.memory_space<vmem>>, vector<1x32x128xf32>
    %36 = vector.shape_cast %35 : vector<1x32x128xf32> to vector<32x128xf32>
    %37 = vector.shape_cast %34 : vector<32x128xf32> to vector<1x32x128xf32>
    tpu.vector_store %arg16[%c0_31, %c0_32, %c4_33], %37 {strides = array<i32>} : memref<1x32x136xf32, #tpu.memory_space<vmem>>, vector<1x32x128xf32>,
    %c0_34 = arith.constant 0 : index
    %c0_35 = arith.constant 0 : index
    %c0_36 = arith.constant 0 : index
    %38 = vector.load %arg16[%c0_34, %c0_35, %c0_36] : memref<1x32x136xf32, #tpu.memory_space<vmem>>, vector<1x32x128xf32>
    %39 = vector.shape_cast %38 : vector<1x32x128xf32> to vector<32x128xf32>
    %40 = arith.truncf %39 : vector<32x128xf32> to vector<32x128xbf16>
    %c0_37 = arith.constant 0 : index
    %c0_38 = arith.constant 0 : index
    %c4_39 = arith.constant 4 : index
    %41 = vector.load %arg16[%c0_37, %c0_38, %c4_39] : memref<1x32x136xf32, #tpu.memory_space<vmem>>, vector<1x32x128xf32>
    %42 = vector.shape_cast %41 : vector<1x32x128xf32> to vector<32x128xf32>
    %43 = arith.truncf %42 : vector<32x128xf32> to vector<32x128xbf16>
    %c0_40 = arith.constant 0 : index
    %c0_41 = arith.constant 0 : index
    %c8 = arith.constant 8 : index
    %44 = vector.load %arg16[%c0_40, %c0_41, %c8] : memref<1x32x136xf32, #tpu.memory_space<vmem>>, vector<1x32x128xf32>
    %45 = vector.shape_cast %44 : vector<1x32x128xf32> to vector<32x128xf32>
    %46 = arith.truncf %45 : vector<32x128xf32> to vector<32x128xbf16>
    %47 = tpu.concatenate %40, %43, %46 in 0 : vector<32x128xbf16>, vector<32x128xbf16>, vector<32x128xbf16> -> vector<96x128xbf16>
    %c0_42 = arith.constant 0 : index
    %c0_43 = arith.constant 0 : index
    %48 = vector.load %arg8[%c0_42, %c0_43] : memref<32x96xbf16, #tpu.memory_space<vmem>>, vector<32x96xbf16>
    %cst_44 = arith.constant dense<0.000000e+00> : vector<32x128xf32>
    %49 = tpu.matmul %48, %47, %cst_44 {dimension_numbers = #tpu.dot_dimension_numbers<[1], [0], [0], [1], [0, 0, 1, 1], [], []>} : vector<32x96xbf16>, vector<96x128xbf16>, vector<32x128xf32> -> vector<32x128xf32>
    %c0_45 = arith.constant 0 : index
    %c0_46 = arith.constant 0 : index
    %50 = vector.load %arg9[%c0_45, %c0_46] : memref<32x1xf32, #tpu.memory_space<vmem>>, vector<32x1xf32>
    %51 = vector.broadcast %50 : vector<32x1xf32> to vector<32x128xf32>
    %52 = arith.addf %49, %51 : vector<32x128xf32>
    %cst_47 = arith.constant 0.000000e+00 : f32
    %53 = vector.broadcast %cst_47 : f32 to vector<32x128xf32>
    %54 = arith.maximumf %52, %53 : vector<32x128xf32>
    %55 = vector.extract_strided_slice %54 {offsets = [0, 8], sizes = [32, 112], strides = [1, 1]} : vector<32x128xf32> to vector<32x112xf32>
    %56 = arith.truncf %55 : vector<32x112xf32> to vector<32x112xbf16>
    %c0_48 = arith.constant 0 : index
    %c0_49 = arith.constant 0 : index
    %57 = vector.load %arg12[%c0_48, %c0_49] : memref<8x8xbf16, #tpu.memory_space<vmem>>, vector<8x8xbf16>
    %c0_50 = arith.constant 0 : index
    %c0_51 = arith.constant 0 : index
    %c0_52 = arith.constant 0 : index
    %58 = vector.load %arg2[%c0_50, %c0_51, %c0_52] : memref<1x8x104xbf16, #tpu.memory_space<vmem>>, vector<1x8x104xbf16>
    %59 = vector.shape_cast %58 : vector<1x8x104xbf16> to vector<8x104xbf16>
    %cst_53 = arith.constant dense<0.000000e+00> : vector<8x104xf32>
    %60 = tpu.matmul %57, %59, %cst_53 {dimension_numbers = #tpu.dot_dimension_numbers<[1], [0], [0], [1], [0, 0, 1, 1], [], []>} : vector<8x8xbf16>, vector<8x104xbf16>, vector<8x104xf32> -> vector<8x104xf32>
    %c0_54 = arith.constant 0 : index
    %c0_55 = arith.constant 0 : index
    %c0_56 = arith.constant 0 : index
    %61 = vector.load %arg10[%c0_54, %c0_55, %c0_56] : memref<9x8x32xbf16, #tpu.memory_space<vmem>>, vector<1x8x32xbf16>
    %62 = vector.shape_cast %61 : vector<1x8x32xbf16> to vector<8x32xbf16>
    %63 = vector.extract_strided_slice %56 {offsets = [0, 0], sizes = [32, 104], strides = [1, 1]} : vector<32x112xbf16> to vector<32x104xbf16>
    %cst_57 = arith.constant dense<0.000000e+00> : vector<8x104xf32>
    %64 = tpu.matmul %62, %63, %cst_57 {dimension_numbers = #tpu.dot_dimension_numbers<[1], [0], [0], [1], [0, 0, 1, 1], [], []>} : vector<8x32xbf16>, vector<32x104xbf16>, vector<8x104xf32> -> vector<8x104xf32>
    %65 = arith.addf %60, %64 : vector<8x104xf32>
    %c1 = arith.constant 1 : index
    %c0_58 = arith.constant 0 : index
    %c0_59 = arith.constant 0 : index
    %66 = vector.load %arg10[%c1, %c0_58, %c0_59] : memref<9x8x32xbf16, #tpu.memory_space<vmem>>, vector<1x8x32xbf16>
    %67 = vector.shape_cast %66 : vector<1x8x32xbf16> to vector<8x32xbf16>
    %68 = vector.extract_strided_slice %56 {offsets = [0, 1], sizes = [32, 104], strides = [1, 1]} : vector<32x112xbf16> to vector<32x104xbf16>
    %cst_60 = arith.constant dense<0.000000e+00> : vector<8x104xf32>
    %69 = tpu.matmul %67, %68, %cst_60 {dimension_numbers = #tpu.dot_dimension_numbers<[1], [0], [0], [1], [0, 0, 1, 1], [], []>} : vector<8x32xbf16>, vector<32x104xbf16>, vector<8x104xf32> -> vector<8x104xf32>
    %70 = arith.addf %65, %69 : vector<8x104xf32>
    %c2_61 = arith.constant 2 : index
    %c0_62 = arith.constant 0 : index
    %c0_63 = arith.constant 0 : index
    %71 = vector.load %arg10[%c2_61, %c0_62, %c0_63] : memref<9x8x32xbf16, #tpu.memory_space<vmem>>, vector<1x8x32xbf16>
    %72 = vector.shape_cast %71 : vector<1x8x32xbf16> to vector<8x32xbf16>
    %73 = vector.extract_strided_slice %56 {offsets = [0, 2], sizes = [32, 104], strides = [1, 1]} : vector<32x112xbf16> to vector<32x104xbf16>
    %cst_64 = arith.constant dense<0.000000e+00> : vector<8x104xf32>
    %74 = tpu.matmul %72, %73, %cst_64 {dimension_numbers = #tpu.dot_dimension_numbers<[1], [0], [0], [1], [0, 0, 1, 1], [], []>} : vector<8x32xbf16>, vector<32x104xbf16>, vector<8x104xf32> -> vector<8x104xf32>
    %75 = arith.addf %70, %74 : vector<8x104xf32>
    %c3 = arith.constant 3 : index
    %c0_65 = arith.constant 0 : index
    %c0_66 = arith.constant 0 : index
    %76 = vector.load %arg10[%c3, %c0_65, %c0_66] : memref<9x8x32xbf16, #tpu.memory_space<vmem>>, vector<1x8x32xbf16>
    %77 = vector.shape_cast %76 : vector<1x8x32xbf16> to vector<8x32xbf16>
    %78 = vector.extract_strided_slice %56 {offsets = [0, 3], sizes = [32, 104], strides = [1, 1]} : vector<32x112xbf16> to vector<32x104xbf16>
    %cst_67 = arith.constant dense<0.000000e+00> : vector<8x104xf32>
    %79 = tpu.matmul %77, %78, %cst_67 {dimension_numbers = #tpu.dot_dimension_numbers<[1], [0], [0], [1], [0, 0, 1, 1], [], []>} : vector<8x32xbf16>, vector<32x104xbf16>, vector<8x104xf32> -> vector<8x104xf32>
    %80 = arith.addf %75, %79 : vector<8x104xf32>
    %c4_68 = arith.constant 4 : index
    %c0_69 = arith.constant 0 : index
    %c0_70 = arith.constant 0 : index
    %81 = vector.load %arg10[%c4_68, %c0_69, %c0_70] : memref<9x8x32xbf16, #tpu.memory_space<vmem>>, vector<1x8x32xbf16>
    %82 = vector.shape_cast %81 : vector<1x8x32xbf16> to vector<8x32xbf16>
    %83 = vector.extract_strided_slice %56 {offsets = [0, 4], sizes = [32, 104], strides = [1, 1]} : vector<32x112xbf16> to vector<32x104xbf16>
    %cst_71 = arith.constant dense<0.000000e+00> : vector<8x104xf32>
    %84 = tpu.matmul %82, %83, %cst_71 {dimension_numbers = #tpu.dot_dimension_numbers<[1], [0], [0], [1], [0, 0, 1, 1], [], []>} : vector<8x32xbf16>, vector<32x104xbf16>, vector<8x104xf32> -> vector<8x104xf32>
    %85 = arith.addf %80, %84 : vector<8x104xf32>
    %c5 = arith.constant 5 : index
    %c0_72 = arith.constant 0 : index
    %c0_73 = arith.constant 0 : index
    %86 = vector.load %arg10[%c5, %c0_72, %c0_73] : memref<9x8x32xbf16, #tpu.memory_space<vmem>>, vector<1x8x32xbf16>
    %87 = vector.shape_cast %86 : vector<1x8x32xbf16> to vector<8x32xbf16>
    %88 = vector.extract_strided_slice %56 {offsets = [0, 5], sizes = [32, 104], strides = [1, 1]} : vector<32x112xbf16> to vector<32x104xbf16>
    %cst_74 = arith.constant dense<0.000000e+00> : vector<8x104xf32>
    %89 = tpu.matmul %87, %88, %cst_74 {dimension_numbers = #tpu.dot_dimension_numbers<[1], [0], [0], [1], [0, 0, 1, 1], [], []>} : vector<8x32xbf16>, vector<32x104xbf16>, vector<8x104xf32> -> vector<8x104xf32>
    %90 = arith.addf %85, %89 : vector<8x104xf32>
    %c6_75 = arith.constant 6 : index
    %c0_76 = arith.constant 0 : index
    %c0_77 = arith.constant 0 : index
    %91 = vector.load %arg10[%c6_75, %c0_76, %c0_77] : memref<9x8x32xbf16, #tpu.memory_space<vmem>>, vector<1x8x32xbf16>
    %92 = vector.shape_cast %91 : vector<1x8x32xbf16> to vector<8x32xbf16>
    %93 = vector.extract_strided_slice %56 {offsets = [0, 6], sizes = [32, 104], strides = [1, 1]} : vector<32x112xbf16> to vector<32x104xbf16>
    %cst_78 = arith.constant dense<0.000000e+00> : vector<8x104xf32>
    %94 = tpu.matmul %92, %93, %cst_78 {dimension_numbers = #tpu.dot_dimension_numbers<[1], [0], [0], [1], [0, 0, 1, 1], [], []>} : vector<8x32xbf16>, vector<32x104xbf16>, vector<8x104xf32> -> vector<8x104xf32>
    %95 = arith.addf %90, %94 : vector<8x104xf32>
    %c7 = arith.constant 7 : index
    %c0_79 = arith.constant 0 : index
    %c0_80 = arith.constant 0 : index
    %96 = vector.load %arg10[%c7, %c0_79, %c0_80] : memref<9x8x32xbf16, #tpu.memory_space<vmem>>, vector<1x8x32xbf16>
    %97 = vector.shape_cast %96 : vector<1x8x32xbf16> to vector<8x32xbf16>
    %98 = vector.extract_strided_slice %56 {offsets = [0, 7], sizes = [32, 104], strides = [1, 1]} : vector<32x112xbf16> to vector<32x104xbf16>
    %cst_81 = arith.constant dense<0.000000e+00> : vector<8x104xf32>
    %99 = tpu.matmul %97, %98, %cst_81 {dimension_numbers = #tpu.dot_dimension_numbers<[1], [0], [0], [1], [0, 0, 1, 1], [], []>} : vector<8x32xbf16>, vector<32x104xbf16>, vector<8x104xf32> -> vector<8x104xf32>
    %100 = arith.addf %95, %99 : vector<8x104xf32>
    %c8_82 = arith.constant 8 : index
    %c0_83 = arith.constant 0 : index
    %c0_84 = arith.constant 0 : index
    %101 = vector.load %arg10[%c8_82, %c0_83, %c0_84] : memref<9x8x32xbf16, #tpu.memory_space<vmem>>, vector<1x8x32xbf16>
    %102 = vector.shape_cast %101 : vector<1x8x32xbf16> to vector<8x32xbf16>
    %103 = vector.extract_strided_slice %56 {offsets = [0, 8], sizes = [32, 104], strides = [1, 1]} : vector<32x112xbf16> to vector<32x104xbf16>
    %cst_85 = arith.constant dense<0.000000e+00> : vector<8x104xf32>
    %104 = tpu.matmul %102, %103, %cst_85 {dimension_numbers = #tpu.dot_dimension_numbers<[1], [0], [0], [1], [0, 0, 1, 1], [], []>} : vector<8x32xbf16>, vector<32x104xbf16>, vector<8x104xf32> -> vector<8x104xf32>
    %105 = arith.addf %100, %104 : vector<8x104xf32>
    %c0_86 = arith.constant 0 : index
    %c0_87 = arith.constant 0 : index
    %106 = vector.load %arg11[%c0_86, %c0_87] : memref<8x1xf32, #tpu.memory_space<vmem>>, vector<8x1xf32>
    %107 = vector.broadcast %106 : vector<8x1xf32> to vector<8x104xf32>
    %108 = arith.addf %105, %107 : vector<8x104xf32>
    %c0_88 = arith.constant 0 : index
    %c0_89 = arith.constant 0 : index
    %c0_90 = arith.constant 0 : index
    %109 = vector.load %arg14[%c0_88, %c0_89, %c0_90] : memref<1x8x104xf32, #tpu.memory_space<vmem>>, vector<1x8x104xf32>
    %110 = vector.shape_cast %109 : vector<1x8x104xf32> to vector<8x104xf32>
    %111 = vector.shape_cast %108 : vector<8x104xf32> to vector<1x8x104xf32>
    tpu.vector_store %arg14[%c0_88, %c0_89, %c0_90], %111 {strides = array<i32>} : memref<1x8x104xf32, #tpu.memory_space<vmem>>, vector<1x8x104xf32>,
    %c0_91 = arith.constant 0 : index
    %c0_92 = arith.constant 0 : index
    %112 = vector.load %arg13[%c0_91, %c0_92] : memref<8x32xbf16, #tpu.memory_space<vmem>>, vector<8x32xbf16>
    %cst_93 = arith.constant dense<0.000000e+00> : vector<8x112xf32>
    %113 = tpu.matmul %112, %56, %cst_93 {dimension_numbers = #tpu.dot_dimension_numbers<[1], [0], [0], [1], [0, 0, 1, 1], [], []>} : vector<8x32xbf16>, vector<32x112xbf16>, vector<8x112xf32> -> vector<8x112xf32>
    %cst_94 = arith.constant dense<0.000000e+00> : vector<8xf32>
    %114 = vector.multi_reduction <add>, %113, %cst_94 [1] : vector<8x112xf32> to vector<8xf32>
    %115 = vector.shape_cast %114 : vector<8xf32> to vector<8x1xf32>
    %cst_95 = arith.constant 0.00892857183 : f32
    %116 = vector.broadcast %cst_95 : f32 to vector<8x1xf32>
    %117 = arith.mulf %115, %116 : vector<8x1xf32>
    %c0_96 = arith.constant 0 : index
    %c0_97 = arith.constant 0 : index
    %c0_98 = arith.constant 0 : index
    %118 = vector.load %arg3[%c0_96, %c0_97, %c0_98] : memref<1x8x1xf32, #tpu.memory_space<vmem>>, vector<1x8x1xf32>
    %119 = vector.shape_cast %118 : vector<1x8x1xf32> to vector<8x1xf32>
    %120 = arith.addf %117, %119 : vector<8x1xf32>
    %c0_99 = arith.constant 0 : index
    %c0_100 = arith.constant 0 : index
    %c0_101 = arith.constant 0 : index
    %121 = vector.load %arg15[%c0_99, %c0_100, %c0_101] : memref<1x8x1xf32, #tpu.memory_space<vmem>>, vector<1x8x1xf32>
    %122 = vector.shape_cast %121 : vector<1x8x1xf32> to vector<8x1xf32>
    %123 = vector.shape_cast %120 : vector<8x1xf32> to vector<1x8x1xf32>
    tpu.vector_store %arg15[%c0_99, %c0_100, %c0_101], %123 {strides = array<i32>} : memref<1x8x1xf32, #tpu.memory_space<vmem>>, vector<1x8x1xf32>,
    return
  }
  func.func @transform_0(%arg0: i32) -> (i32, i32, i32) {
    %c0_i32 = arith.constant 0 : i32
    %c0_i32_0 = arith.constant 0 : i32
    %c0_i32_1 = arith.constant 0 : i32
    return %arg0, %c0_i32, %c0_i32_0 : i32, i32, i32
  }
  func.func @transform_1(%arg0: i32) -> (i32, i32, i32) {
    %c0_i32 = arith.constant 0 : i32
    %c0_i32_0 = arith.constant 0 : i32
    %c0_i32_1 = arith.constant 0 : i32
    return %arg0, %c0_i32, %c0_i32_0 : i32, i32, i32
  }
  func.func @transform_2(%arg0: i32) -> (i32, i32, i32) {
    %c0_i32 = arith.constant 0 : i32
    %c0_i32_0 = arith.constant 0 : i32
    %c0_i32_1 = arith.constant 0 : i32
    return %arg0, %c0_i32, %c0_i32_0 : i32, i32, i32
  }
  func.func @transform_3(%arg0: i32) -> (i32, i32) {
    %c0_i32 = arith.constant 0 : i32
    %c0_i32_0 = arith.constant 0 : i32
    %c0_i32_1 = arith.constant 0 : i32
    return %c0_i32, %c0_i32_0 : i32, i32
  }
  func.func @transform_4(%arg0: i32) -> (i32, i32) {
    %c0_i32 = arith.constant 0 : i32
    %c0_i32_0 = arith.constant 0 : i32
    %c0_i32_1 = arith.constant 0 : i32
    return %c0_i32, %c0_i32_0 : i32, i32
  }
  func.func @transform_5(%arg0: i32) -> (i32, i32) {
    %c0_i32 = arith.constant 0 : i32
    %c0_i32_0 = arith.constant 0 : i32
    %c0_i32_1 = arith.constant 0 : i32
    return %c0_i32, %c0_i32_0 : i32, i32
  }
  func.func @transform_6(%arg0: i32) -> (i32, i32) {
    %c0_i32 = arith.constant 0 : i32
    %c0_i32_0 = arith.constant 0 : i32
    %c0_i32_1 = arith.constant 0 : i32
    return %c0_i32, %c0_i32_0 : i32, i32
  }
  func.func @transform_7(%arg0: i32) -> (i32, i32) {
    %c0_i32 = arith.constant 0 : i32
    %c0_i32_0 = arith.constant 0 : i32
    %c0_i32_1 = arith.constant 0 : i32
    return %c0_i32, %c0_i32_0 : i32, i32
  }
  func.func @transform_8(%arg0: i32) -> (i32, i32) {
    %c0_i32 = arith.constant 0 : i32
    %c0_i32_0 = arith.constant 0 : i32
    %c0_i32_1 = arith.constant 0 : i32
    return %c0_i32, %c0_i32_0 : i32, i32
  }
  func.func @transform_9(%arg0: i32) -> (i32, i32, i32) {
    %c0_i32 = arith.constant 0 : i32
    %c0_i32_0 = arith.constant 0 : i32
    %c0_i32_1 = arith.constant 0 : i32
    %c0_i32_2 = arith.constant 0 : i32
    return %c0_i32, %c0_i32_0, %c0_i32_1 : i32, i32, i32
  }
  func.func @transform_10(%arg0: i32) -> (i32, i32) {
    %c0_i32 = arith.constant 0 : i32
    %c0_i32_0 = arith.constant 0 : i32
    %c0_i32_1 = arith.constant 0 : i32
    return %c0_i32, %c0_i32_0 : i32, i32
  }
  func.func @transform_11(%arg0: i32) -> (i32, i32) {
    %c0_i32 = arith.constant 0 : i32
    %c0_i32_0 = arith.constant 0 : i32
    %c0_i32_1 = arith.constant 0 : i32
    return %c0_i32, %c0_i32_0 : i32, i32
  }
  func.func @transform_12(%arg0: i32) -> (i32, i32) {
    %c0_i32 = arith.constant 0 : i32
    %c0_i32_0 = arith.constant 0 : i32
    %c0_i32_1 = arith.constant 0 : i32
    return %c0_i32, %c0_i32_0 : i32, i32
  }
  func.func @transform_13(%arg0: i32) -> (i32, i32, i32) {
    %c0_i32 = arith.constant 0 : i32
    %c0_i32_0 = arith.constant 0 : i32
    %c0_i32_1 = arith.constant 0 : i32
    return %arg0, %c0_i32, %c0_i32_0 : i32, i32, i32
  }
  func.func @transform_14(%arg0: i32) -> (i32, i32, i32) {
    %c0_i32 = arith.constant 0 : i32
    %c0_i32_0 = arith.constant 0 : i32
    %c0_i32_1 = arith.constant 0 : i32
    return %arg0, %c0_i32, %c0_i32_0 : i32, i32, i32
  }
}

</mosaic_0001>

<llo_original>
// kernel: squeeze.1
$region0: #{squeeze.1}
  %s0 = inlined_call_operand.vmem [shape: f32[2,6], index: 0, kind: input, shape index: {}]
  %s1 = inlined_call_operand.vmem [shape: f32[2,3,2], index: 1, kind: output, shape index: {}]
  $region1: #{squeeze.1} parent=0
    #allocation0 [shape = 'u8[8192]{0}', space=vmem, size = 0x2000, scoped, tag = 'scoped mem for output reshape']
    #allocation1 [shape = 'u8[4096]{0}', space=vmem, size = 0x1000, scoped, tag = 'scoped mem for input reshape']
    %s3 = sshllo.u32 0, 2
    %v4 = vld [vmem:[%s0] sm:%s3]
    %5 = vst [vmem:[#allocation1] sm:%s3] %v4
    %v6 = vld [vmem:[#allocation1] sm:$0x3]
    %vm7 = vcmask 15360
    %8 = vst.msk [vmem:[#allocation0] ss:$8 sm:$0x3] %vm7, %v6
    %v9 = vld [vmem:[#allocation1] sm:$0x3]
    %10 = vrot.lane.b32.xlu0 %v9, 126
    %v11 = vpop.permute.xlu0 %10
    %vm12 = vcmask 15360
    %s13 = scalar_lea.vmem [#allocation0], 1
    %14 = vst.msk [vmem:[%s13] ss:$8 sm:$0x3] %vm12, %v11
    %v15 = vld [vmem:[#allocation1] sm:$0x3]
    %16 = vrot.lane.b32.xlu0 %v15, 124
    %v17 = vpop.permute.xlu0 %16
    %vm18 = vcmask 15360
    %s19 = scalar_lea.vmem [#allocation0], 2
    %20 = vst.msk [vmem:[%s19] ss:$8 sm:$0x3] %vm18, %v17
    %s22 = sshllo.u32 0, 4
    %v24 = vld [vmem:[#allocation0] sm:%s22]
    %s25 = sshllo.u32 0, 4
    %26 = vst [vmem:[%s1] sm:%s25] %v24
    %s27 = scalar_lea.vmem [#allocation0], 8
    %v28 = vld [vmem:[%s27] sm:%s22]
    %s29 = sshllo.u32 0, 4
    %s30 = scalar_lea.vmem %s1, 4
    %31 = vst [vmem:[%s30] sm:%s29] %v28

// kernel: _lambda_.1
$region0: #{_lambda_.1}
  #allocation0 [shape = 'u32[]', space=smem, size = 0x4, offset = 0x4, fixed_abs, tag = 'smem constant byte address 0x4 - core index']
  #allocation1 [shape = 'u32[144,128]{1,0:T(1,128)}', space=vmem, size = 0x12000, scoped, tag = 'internal scratch']
  #allocation2 [shape = 'f32[1,32,136]{2,1,0:T(8,128)}', space=vmem, size = 0x8000, scoped, tag = 'scratch operand']
  %s0 = inlined_call_operand.vmem [shape: bf16[2,32,128], index: 0, kind: input, shape index: {}]
  %s1 = inlined_call_operand.vmem [shape: bf16[2,8,104], index: 1, kind: input, shape index: {}]
  %s2 = inlined_call_operand.vmem [shape: f32[2,8,1], index: 2, kind: input, shape index: {}]
  %s3 = inlined_call_operand.vmem [shape: bf16[32,32], index: 3, kind: input, shape index: {}]
  %s4 = inlined_call_operand.vmem [shape: f32[32,1], index: 4, kind: input, shape index: {}]
  %s5 = inlined_call_operand.vmem [shape: bf16[32,96], index: 5, kind: input, shape index: {}]
  %s6 = inlined_call_operand.vmem [shape: f32[32,1], index: 6, kind: input, shape index: {}]
  %s7 = inlined_call_operand.vmem [shape: bf16[32,96], index: 7, kind: input, shape index: {}]
  %s8 = inlined_call_operand.vmem [shape: f32[32,1], index: 8, kind: input, shape index: {}]
  %s9 = inlined_call_operand.vmem [shape: bf16[9,8,32], index: 9, kind: input, shape index: {}]
  %s10 = inlined_call_operand.vmem [shape: f32[8,1], index: 10, kind: input, shape index: {}]
  %s11 = inlined_call_operand.vmem [shape: bf16[8,8], index: 11, kind: input, shape index: {}]
  %s12 = inlined_call_operand.vmem [shape: bf16[8,32], index: 12, kind: input, shape index: {}]
  %s13 = inlined_call_operand.vmem [shape: f32[2,8,104], index: 13, kind: output, shape index: {0}]
  %s14 = inlined_call_operand.vmem [shape: f32[2,8,1], index: 14, kind: output, shape index: {1}]
  %15 = xla_tuple %s13, %s14
  %s16 = sld [smem:[#allocation0]]
  $region93: #{_lambda_.1} parent=0
    _
  %s18 = ssub.s32 1, %s16
  %s19 = scalar_select 0, %s18, %s16
  loop: start=0, step=1, limit=4
  $region2: #{_lambda_.1} parent=0 // loop_pre_header
    _
  $region3: #{_lambda_.1} parent=0 // loop_header
    %s21 = sphi 0, %s25
    %p22 = scmp.ge.s32.totalorder %s21, 4
    %s31 = sphi 0, %s33
    %s34 = sphi 0, %s31
    %s35 = sphi 0, %s34
    %s51 = sphi 0, %s35
    %s57 = sphi 0, %s59
    %s60 = sphi 0, %s57
    %s61 = sphi 0, %s60
    %s77 = sphi 0, %s61
    %s83 = sphi 0, %s85
    %s86 = sphi 0, %s83
    %s87 = sphi 0, %s86
    %s103 = sphi 0, %s87
    %s107 = sphi 0, %s107
    %s109 = sphi 0, %s107
    %s110 = sphi 0, %s109
    %s124 = sphi 0, %s110
    %s128 = sphi 0, %s128
    %s130 = sphi 0, %s128
    %s131 = sphi 0, %s130
    %s145 = sphi 0, %s131
    %s149 = sphi 0, %s149
    %s151 = sphi 0, %s149
    %s152 = sphi 0, %s151
    %s166 = sphi 0, %s152
    %s170 = sphi 0, %s170
    %s172 = sphi 0, %s170
    %s173 = sphi 0, %s172
    %s187 = sphi 0, %s173
    %s191 = sphi 0, %s191
    %s193 = sphi 0, %s191
    %s194 = sphi 0, %s193
    %s208 = sphi 0, %s194
    %s212 = sphi 0, %s212
    %s214 = sphi 0, %s212
    %s215 = sphi 0, %s214
    %s229 = sphi 0, %s215
    %s233 = sphi 0, %s233
    %s235 = sphi 0, %s233
    %s236 = sphi 0, %s235
    %s250 = sphi 0, %s236
    %s254 = sphi 0, %s254
    %s256 = sphi 0, %s254
    %s257 = sphi 0, %s256
    %s271 = sphi 0, %s257
    %s275 = sphi 0, %s275
    %s277 = sphi 0, %s275
    %s278 = sphi 0, %s277
    %s292 = sphi 0, %s278
    %s296 = sphi 0, %s296
    %s298 = sphi 0, %s296
    %s299 = sphi 0, %s298
    %s313 = sphi 0, %s299
    %s319 = sphi 0, %s321
    %s322 = sphi 0, %s319
    %s323 = sphi 0, %s322
    %s339 = sphi 0, %s323
    %s345 = sphi 0, %s347
    %s348 = sphi 0, %s345
    %s349 = sphi 0, %s348
    %s365 = sphi 0, %s349
  $region4: #{_lambda_.1} parent=0 // loop_header_branch
    %24 = sbr.rel (%p22) target = $region8
  $region5: #{_lambda_.1} parent=0 // loop_body
    %s26 = ssub.s32 %s21, 1
    %s27 = ssub.s32 %s21, 2
    %s28 = sadd.s32 %s21, 1
    %s29 = ssub.s32 %s21, %s28
    %p30 = scmp.eq.s32.totalorder %s29, 0
    %s32 = sadd.s32 %s31, 1
    %s33 = scalar_select %p30, %s31, %s32
    %p36 = pneg %p30
    %p37 = scmp.eq.s32.totalorder %s21, 1
    %p38 = por %p36, %p37
    %p39 = scmp.ne.s32.totalorder %s31, %s34
    %p40 = scmp.eq.s32.totalorder %s21, 0
    %p41 = por %p39, %p40
    %p42 = scmp.ne.s32.totalorder %s31, %s34
    %p43 = scmp.eq.s32.totalorder %s26, 1
    %p44 = por %p42, %p43
    %p45 = scmp.ne.s32.totalorder %s34, %s35
    %p46 = scmp.eq.s32.totalorder %s26, 0
    %p47 = por %p45, %p46
    %p48 = scmp.ne.s32.totalorder %s34, %s35
    %p49 = scmp.eq.s32.totalorder %s27, 1
    %p50 = por %p48, %p49
    %p52 = scmp.ne.s32.totalorder %s35, %s51
    %p53 = scmp.eq.s32.totalorder %s27, 0
    %p54 = por %p52, %p53
    %s55 = ssub.s32 %s21, %s28
    %p56 = scmp.eq.s32.totalorder %s55, 0
    %s58 = sadd.s32 %s57, 1
    %s59 = scalar_select %p56, %s57, %s58
    %p62 = pneg %p56
    %p63 = scmp.eq.s32.totalorder %s21, 1
    %p64 = por %p62, %p63
    %p65 = scmp.ne.s32.totalorder %s57, %s60
    %p66 = scmp.eq.s32.totalorder %s21, 0
    %p67 = por %p65, %p66
    %p68 = scmp.ne.s32.totalorder %s57, %s60
    %p69 = scmp.eq.s32.totalorder %s26, 1
    %p70 = por %p68, %p69
    %p71 = scmp.ne.s32.totalorder %s60, %s61
    %p72 = scmp.eq.s32.totalorder %s26, 0
    %p73 = por %p71, %p72
    %p74 = scmp.ne.s32.totalorder %s60, %s61
    %p75 = scmp.eq.s32.totalorder %s27, 1
    %p76 = por %p74, %p75
    %p78 = scmp.ne.s32.totalorder %s61, %s77
    %p79 = scmp.eq.s32.totalorder %s27, 0
    %p80 = por %p78, %p79
    %s81 = ssub.s32 %s21, %s28
    %p82 = scmp.eq.s32.totalorder %s81, 0
    %s84 = sadd.s32 %s83, 1
    %s85 = scalar_select %p82, %s83, %s84
    %p88 = pneg %p82
    %p89 = scmp.eq.s32.totalorder %s21, 1
    %p90 = por %p88, %p89
    %p91 = scmp.ne.s32.totalorder %s83, %s86
    %p92 = scmp.eq.s32.totalorder %s21, 0
    %p93 = por %p91, %p92
    %p94 = scmp.ne.s32.totalorder %s83, %s86
    %p95 = scmp.eq.s32.totalorder %s26, 1
    %p96 = por %p94, %p95
    %p97 = scmp.ne.s32.totalorder %s86, %s87
    %p98 = scmp.eq.s32.totalorder %s26, 0
    %p99 = por %p97, %p98
    %p100 = scmp.ne.s32.totalorder %s86, %s87
    %p101 = scmp.eq.s32.totalorder %s27, 1
    %p102 = por %p100, %p101
    %p104 = scmp.ne.s32.totalorder %s87, %s103
    %p105 = scmp.eq.s32.totalorder %s27, 0
    %p106 = por %p104, %p105
    %s108 = sadd.s32 %s107, 1
    %p111 = scmp.eq.s32.totalorder %s21, 1
    %p112 = scmp.ne.s32.totalorder %s107, %s109
    %p113 = scmp.eq.s32.totalorder %s21, 0
    %p114 = por %p112, %p113
    %p115 = scmp.ne.s32.totalorder %s107, %s109
    %p116 = scmp.eq.s32.totalorder %s26, 1
    %p117 = por %p115, %p116
    %p118 = scmp.ne.s32.totalorder %s109, %s110
    %p119 = scmp.eq.s32.totalorder %s26, 0
    %p120 = por %p118, %p119
    %p121 = scmp.ne.s32.totalorder %s109, %s110
    %p122 = scmp.eq.s32.totalorder %s27, 1
    %p123 = por %p121, %p122
    %p125 = scmp.ne.s32.totalorder %s110, %s124
    %p126 = scmp.eq.s32.totalorder %s27, 0
    %p127 = por %p125, %p126
    %s129 = sadd.s32 %s128, 1
    %p132 = scmp.eq.s32.totalorder %s21, 1
    %p133 = scmp.ne.s32.totalorder %s128, %s130
    %p134 = scmp.eq.s32.totalorder %s21, 0
    %p135 = por %p133, %p134
    %p136 = scmp.ne.s32.totalorder %s128, %s130
    %p137 = scmp.eq.s32.totalorder %s26, 1
    %p138 = por %p136, %p137
    %p139 = scmp.ne.s32.totalorder %s130, %s131
    %p140 = scmp.eq.s32.totalorder %s26, 0
    %p141 = por %p139, %p140
    %p142 = scmp.ne.s32.totalorder %s130, %s131
    %p143 = scmp.eq.s32.totalorder %s27, 1
    %p144 = por %p142, %p143
    %p146 = scmp.ne.s32.totalorder %s131, %s145
    %p147 = scmp.eq.s32.totalorder %s27, 0
    %p148 = por %p146, %p147
    %s150 = sadd.s32 %s149, 1
    %p153 = scmp.eq.s32.totalorder %s21, 1
    %p154 = scmp.ne.s32.totalorder %s149, %s151
    %p155 = scmp.eq.s32.totalorder %s21, 0
    %p156 = por %p154, %p155
    %p157 = scmp.ne.s32.totalorder %s149, %s151
    %p158 = scmp.eq.s32.totalorder %s26, 1
    %p159 = por %p157, %p158
    %p160 = scmp.ne.s32.totalorder %s151, %s152
    %p161 = scmp.eq.s32.totalorder %s26, 0
    %p162 = por %p160, %p161
    %p163 = scmp.ne.s32.totalorder %s151, %s152
    %p164 = scmp.eq.s32.totalorder %s27, 1
    %p165 = por %p163, %p164
    %p167 = scmp.ne.s32.totalorder %s152, %s166
    %p168 = scmp.eq.s32.totalorder %s27, 0
    %p169 = por %p167, %p168
    %s171 = sadd.s32 %s170, 1
    %p174 = scmp.eq.s32.totalorder %s21, 1
    %p175 = scmp.ne.s32.totalorder %s170, %s172
    %p176 = scmp.eq.s32.totalorder %s21, 0
    %p177 = por %p175, %p176
    %p178 = scmp.ne.s32.totalorder %s170, %s172
    %p179 = scmp.eq.s32.totalorder %s26, 1
    %p180 = por %p178, %p179
    %p181 = scmp.ne.s32.totalorder %s172, %s173
    %p182 = scmp.eq.s32.totalorder %s26, 0
    %p183 = por %p181, %p182
    %p184 = scmp.ne.s32.totalorder %s172, %s173
    %p185 = scmp.eq.s32.totalorder %s27, 1
    %p186 = por %p184, %p185
    %p188 = scmp.ne.s32.totalorder %s173, %s187
    %p189 = scmp.eq.s32.totalorder %s27, 0
    %p190 = por %p188, %p189
    %s192 = sadd.s32 %s191, 1
    %p195 = scmp.eq.s32.totalorder %s21, 1
    %p196 = scmp.ne.s32.totalorder %s191, %s193
    %p197 = scmp.eq.s32.totalorder %s21, 0
    %p198 = por %p196, %p197
    %p199 = scmp.ne.s32.totalorder %s191, %s193
    %p200 = scmp.eq.s32.totalorder %s26, 1
    %p201 = por %p199, %p200
    %p202 = scmp.ne.s32.totalorder %s193, %s194
    %p203 = scmp.eq.s32.totalorder %s26, 0
    %p204 = por %p202, %p203
    %p205 = scmp.ne.s32.totalorder %s193, %s194
    %p206 = scmp.eq.s32.totalorder %s27, 1
    %p207 = por %p205, %p206
    %p209 = scmp.ne.s32.totalorder %s194, %s208
    %p210 = scmp.eq.s32.totalorder %s27, 0
    %p211 = por %p209, %p210
    %s213 = sadd.s32 %s212, 1
    %p216 = scmp.eq.s32.totalorder %s21, 1
    %p217 = scmp.ne.s32.totalorder %s212, %s214
    %p218 = scmp.eq.s32.totalorder %s21, 0
    %p219 = por %p217, %p218
    %p220 = scmp.ne.s32.totalorder %s212, %s214
    %p221 = scmp.eq.s32.totalorder %s26, 1
    %p222 = por %p220, %p221
    %p223 = scmp.ne.s32.totalorder %s214, %s215
    %p224 = scmp.eq.s32.totalorder %s26, 0
    %p225 = por %p223, %p224
    %p226 = scmp.ne.s32.totalorder %s214, %s215
    %p227 = scmp.eq.s32.totalorder %s27, 1
    %p228 = por %p226, %p227
    %p230 = scmp.ne.s32.totalorder %s215, %s229
    %p231 = scmp.eq.s32.totalorder %s27, 0
    %p232 = por %p230, %p231
    %s234 = sadd.s32 %s233, 1
    %p237 = scmp.eq.s32.totalorder %s21, 1
    %p238 = scmp.ne.s32.totalorder %s233, %s235
    %p239 = scmp.eq.s32.totalorder %s21, 0
    %p240 = por %p238, %p239
    %p241 = scmp.ne.s32.totalorder %s233, %s235
    %p242 = scmp.eq.s32.totalorder %s26, 1
    %p243 = por %p241, %p242
    %p244 = scmp.ne.s32.totalorder %s235, %s236
    %p245 = scmp.eq.s32.totalorder %s26, 0
    %p246 = por %p244, %p245
    %p247 = scmp.ne.s32.totalorder %s235, %s236
    %p248 = scmp.eq.s32.totalorder %s27, 1
    %p249 = por %p247, %p248
    %p251 = scmp.ne.s32.totalorder %s236, %s250
    %p252 = scmp.eq.s32.totalorder %s27, 0
    %p253 = por %p251, %p252
    %s255 = sadd.s32 %s254, 1
    %p258 = scmp.eq.s32.totalorder %s21, 1
    %p259 = scmp.ne.s32.totalorder %s254, %s256
    %p260 = scmp.eq.s32.totalorder %s21, 0
    %p261 = por %p259, %p260
    %p262 = scmp.ne.s32.totalorder %s254, %s256
    %p263 = scmp.eq.s32.totalorder %s26, 1
    %p264 = por %p262, %p263
    %p265 = scmp.ne.s32.totalorder %s256, %s257
    %p266 = scmp.eq.s32.totalorder %s26, 0
    %p267 = por %p265, %p266
    %p268 = scmp.ne.s32.totalorder %s256, %s257
    %p269 = scmp.eq.s32.totalorder %s27, 1
    %p270 = por %p268, %p269
    %p272 = scmp.ne.s32.totalorder %s257, %s271
    %p273 = scmp.eq.s32.totalorder %s27, 0
    %p274 = por %p272, %p273
    %s276 = sadd.s32 %s275, 1
    %p279 = scmp.eq.s32.totalorder %s21, 1
    %p280 = scmp.ne.s32.totalorder %s275, %s277
    %p281 = scmp.eq.s32.totalorder %s21, 0
    %p282 = por %p280, %p281
    %p283 = scmp.ne.s32.totalorder %s275, %s277
    %p284 = scmp.eq.s32.totalorder %s26, 1
    %p285 = por %p283, %p284
    %p286 = scmp.ne.s32.totalorder %s277, %s278
    %p287 = scmp.eq.s32.totalorder %s26, 0
    %p288 = por %p286, %p287
    %p289 = scmp.ne.s32.totalorder %s277, %s278
    %p290 = scmp.eq.s32.totalorder %s27, 1
    %p291 = por %p289, %p290
    %p293 = scmp.ne.s32.totalorder %s278, %s292
    %p294 = scmp.eq.s32.totalorder %s27, 0
    %p295 = por %p293, %p294
    %s297 = sadd.s32 %s296, 1
    %p300 = scmp.eq.s32.totalorder %s21, 1
    %p301 = scmp.ne.s32.totalorder %s296, %s298
    %p302 = scmp.eq.s32.totalorder %s21, 0
    %p303 = por %p301, %p302
    %p304 = scmp.ne.s32.totalorder %s296, %s298
    %p305 = scmp.eq.s32.totalorder %s26, 1
    %p306 = por %p304, %p305
    %p307 = scmp.ne.s32.totalorder %s298, %s299
    %p308 = scmp.eq.s32.totalorder %s26, 0
    %p309 = por %p307, %p308
    %p310 = scmp.ne.s32.totalorder %s298, %s299
    %p311 = scmp.eq.s32.totalorder %s27, 1
    %p312 = por %p310, %p311
    %p314 = scmp.ne.s32.totalorder %s299, %s313
    %p315 = scmp.eq.s32.totalorder %s27, 0
    %p316 = por %p314, %p315
    %s317 = ssub.s32 %s21, %s28
    %p318 = scmp.eq.s32.totalorder %s317, 0
    %s320 = sadd.s32 %s319, 1
    %s321 = scalar_select %p318, %s319, %s320
    %p324 = pneg %p318
    %p325 = scmp.eq.s32.totalorder %s21, 1
    %p326 = por %p324, %p325
    %p327 = scmp.ne.s32.totalorder %s319, %s322
    %p328 = scmp.eq.s32.totalorder %s21, 0
    %p329 = por %p327, %p328
    %p330 = scmp.ne.s32.totalorder %s319, %s322
    %p331 = scmp.eq.s32.totalorder %s26, 1
    %p332 = por %p330, %p331
    %p333 = scmp.ne.s32.totalorder %s322, %s323
    %p334 = scmp.eq.s32.totalorder %s26, 0
    %p335 = por %p333, %p334
    %p336 = scmp.ne.s32.totalorder %s322, %s323
    %p337 = scmp.eq.s32.totalorder %s27, 1
    %p338 = por %p336, %p337
    %p340 = scmp.ne.s32.totalorder %s323, %s339
    %p341 = scmp.eq.s32.totalorder %s27, 0
    %p342 = por %p340, %p341
    %s343 = ssub.s32 %s21, %s28
    %p344 = scmp.eq.s32.totalorder %s343, 0
    %s346 = sadd.s32 %s345, 1
    %s347 = scalar_select %p344, %s345, %s346
    %p350 = pneg %p344
    %p351 = scmp.eq.s32.totalorder %s21, 1
    %p352 = por %p350, %p351
    %p353 = scmp.ne.s32.totalorder %s345, %s348
    %p354 = scmp.eq.s32.totalorder %s21, 0
    %p355 = por %p353, %p354
    %p356 = scmp.ne.s32.totalorder %s345, %s348
    %p357 = scmp.eq.s32.totalorder %s26, 1
    %p358 = por %p356, %p357
    %p359 = scmp.ne.s32.totalorder %s348, %s349
    %p360 = scmp.eq.s32.totalorder %s26, 0
    %p361 = por %p359, %p360
    %p362 = scmp.ne.s32.totalorder %s348, %s349
    %p363 = scmp.eq.s32.totalorder %s27, 1
    %p364 = por %p362, %p363
    %p366 = scmp.ne.s32.totalorder %s349, %s365
    %p367 = scmp.eq.s32.totalorder %s27, 0
    %p368 = por %p366, %p367
    %p369 = scmp.le.s32.totalorder 1, %s21
    %p370 = scmp.lt.s32.totalorder %s21, 3
    %p371 = pnand %p369, %p370
    %p372 = pneg %p371
    // Predicated region
    $region9: #{_lambda_.1} parent=5 // pred_check
      _
    $region10: #{_lambda_.1} parent=5 // pred_check_branch
      %374 = sbr.rel (%p371) target = $region12
    $region11: #{_lambda_.1} parent=5 // pred_region
      %s375 = ssub.s32 %s21, 1
      // Predicated region
      $region13: #{_lambda_.1} parent=11 // pred_check
        %p376 = pneg %p120
      $region14: #{_lambda_.1} parent=11 // pred_check_branch
        %378 = sbr.rel (%p376) target = $region16
      $region15: #{_lambda_.1} parent=11 // pred_region
        _
      $region16: #{_lambda_.1} parent=11 // pred_fallthru
        _
      // Predicated region
      $region17: #{_lambda_.1} parent=11 // pred_check
        %p379 = pneg %p141
      $region18: #{_lambda_.1} parent=11 // pred_check_branch
        %381 = sbr.rel (%p379) target = $region20
      $region19: #{_lambda_.1} parent=11 // pred_region
        _
      $region20: #{_lambda_.1} parent=11 // pred_fallthru
        _
      // Predicated region
      $region21: #{_lambda_.1} parent=11 // pred_check
        %p382 = pneg %p162
      $region22: #{_lambda_.1} parent=11 // pred_check_branch
        %384 = sbr.rel (%p382) target = $region24
      $region23: #{_lambda_.1} parent=11 // pred_region
        _
      $region24: #{_lambda_.1} parent=11 // pred_fallthru
        _
      // Predicated region
      $region25: #{_lambda_.1} parent=11 // pred_check
        %p385 = pneg %p183
      $region26: #{_lambda_.1} parent=11 // pred_check_branch
        %387 = sbr.rel (%p385) target = $region28
      $region27: #{_lambda_.1} parent=11 // pred_region
        _
      $region28: #{_lambda_.1} parent=11 // pred_fallthru
        _
      // Predicated region
      $region29: #{_lambda_.1} parent=11 // pred_check
        %p388 = pneg %p204
      $region30: #{_lambda_.1} parent=11 // pred_check_branch
        %390 = sbr.rel (%p388) target = $region32
      $region31: #{_lambda_.1} parent=11 // pred_region
        _
      $region32: #{_lambda_.1} parent=11 // pred_fallthru
        _
      // Predicated region
      $region33: #{_lambda_.1} parent=11 // pred_check
        %p391 = pneg %p225
      $region34: #{_lambda_.1} parent=11 // pred_check_branch
        %393 = sbr.rel (%p391) target = $region36
      $region35: #{_lambda_.1} parent=11 // pred_region
        _
      $region36: #{_lambda_.1} parent=11 // pred_fallthru
        _
      // Predicated region
      $region37: #{_lambda_.1} parent=11 // pred_check
        %p394 = pneg %p246
      $region38: #{_lambda_.1} parent=11 // pred_check_branch
        %396 = sbr.rel (%p394) target = $region40
      $region39: #{_lambda_.1} parent=11 // pred_region
        _
      $region40: #{_lambda_.1} parent=11 // pred_fallthru
        _
      // Predicated region
      $region41: #{_lambda_.1} parent=11 // pred_check
        %p397 = pneg %p267
      $region42: #{_lambda_.1} parent=11 // pred_check_branch
        %399 = sbr.rel (%p397) target = $region44
      $region43: #{_lambda_.1} parent=11 // pred_region
        _
      $region44: #{_lambda_.1} parent=11 // pred_fallthru
        _
      // Predicated region
      $region45: #{_lambda_.1} parent=11 // pred_check
        %p400 = pneg %p288
      $region46: #{_lambda_.1} parent=11 // pred_check_branch
        %402 = sbr.rel (%p400) target = $region48
      $region47: #{_lambda_.1} parent=11 // pred_region
        _
      $region48: #{_lambda_.1} parent=11 // pred_fallthru
        _
      // Predicated region
      $region49: #{_lambda_.1} parent=11 // pred_check
        %p403 = pneg %p309
      $region50: #{_lambda_.1} parent=11 // pred_check_branch
        %405 = sbr.rel (%p403) target = $region52
      $region51: #{_lambda_.1} parent=11 // pred_region
        _
      $region52: #{_lambda_.1} parent=11 // pred_fallthru
        _
    $region12: #{_lambda_.1} parent=5 // pred_fallthru
      _
    %p406 = scmp.lt.s32.totalorder %s21, 2
    // Predicated region
    $region53: #{_lambda_.1} parent=5 // pred_check
      %p407 = pneg %p406
    $region54: #{_lambda_.1} parent=5 // pred_check_branch
      %409 = sbr.rel (%p407) target = $region56
    $region55: #{_lambda_.1} parent=5 // pred_region
      // Predicated region
      $region57: #{_lambda_.1} parent=55 // pred_check
        %p410 = pneg %p41
      $region58: #{_lambda_.1} parent=55 // pred_check_branch
        %412 = sbr.rel (%p410) target = $region60
      $region59: #{_lambda_.1} parent=55 // pred_region
        %p413 = scmp.lt.s32.totalorder %s21, 1
        %s414 = scalar_select %p413, %s21, 1
        %s415 = smul.addr %s414, 4
        %s416 = smul.addr %s415, 4
        %s417 = scalar_lea.vmem %s0, %s416
      $region60: #{_lambda_.1} parent=55 // pred_fallthru
        _
      // Predicated region
      $region61: #{_lambda_.1} parent=55 // pred_check
        %p418 = pneg %p67
      $region62: #{_lambda_.1} parent=55 // pred_check_branch
        %420 = sbr.rel (%p418) target = $region64
      $region63: #{_lambda_.1} parent=55 // pred_region
        %p421 = scmp.lt.s32.totalorder %s21, 1
        %s422 = scalar_select %p421, %s21, 1
        %s423 = smul.addr %s422, 4
        %s424 = scalar_lea.vmem %s1, %s423
      $region64: #{_lambda_.1} parent=55 // pred_fallthru
        _
      // Predicated region
      $region65: #{_lambda_.1} parent=55 // pred_check
        %p425 = pneg %p93
      $region66: #{_lambda_.1} parent=55 // pred_check_branch
        %427 = sbr.rel (%p425) target = $region68
      $region67: #{_lambda_.1} parent=55 // pred_region
        %p428 = scmp.lt.s32.totalorder %s21, 1
        %s429 = scalar_select %p428, %s21, 1
        %s430 = smul.addr %s429, 8
        %s431 = scalar_lea.vmem %s2, %s430
      $region68: #{_lambda_.1} parent=55 // pred_fallthru
        _
    $region56: #{_lambda_.1} parent=5 // pred_fallthru
      _
    %p432 = scmp.le.s32.totalorder 1, %s21
    %p433 = scmp.lt.s32.totalorder %s21, 3
    %p434 = pnand %p432, %p433
    %p435 = pneg %p434
    // Predicated region
    $region69: #{_lambda_.1} parent=5 // pred_check
      _
    $region70: #{_lambda_.1} parent=5 // pred_check_branch
      %437 = sbr.rel (%p434) target = $region72
    $region71: #{_lambda_.1} parent=5 // pred_region
      %s438 = ssub.s32 %s21, 1
      %p439 = scmp.lt.s32.totalorder %s26, 1
      %s440 = scalar_select %p439, %s26, 1
      %s441 = smul.addr %s440, 4
      %s442 = smul.addr %s441, 4
      %s443 = scalar_lea.vmem %s0, %s442
      %p444 = pneg %p47
      %p445 = pneg %p44
      %p446 = scmp.lt.s32.totalorder %s26, 1
      %s447 = scalar_select %p446, %s26, 1
      %s448 = smul.addr %s447, 4
      %s449 = scalar_lea.vmem %s1, %s448
      %p450 = pneg %p73
      %p451 = pneg %p70
      %p452 = scmp.lt.s32.totalorder %s26, 1
      %s453 = scalar_select %p452, %s26, 1
      %s454 = smul.addr %s453, 8
      %s455 = scalar_lea.vmem %s2, %s454
      %p456 = pneg %p99
      %p457 = pneg %p96
      %p458 = pneg %p120
      %p459 = pneg %p117
      %p460 = pneg %p141
      %p461 = pneg %p138
      %p462 = pneg %p162
      %p463 = pneg %p159
      %p464 = pneg %p183
      %p465 = pneg %p180
      %p466 = pneg %p204
      %p467 = pneg %p201
      %p468 = pneg %p225
      %p469 = pneg %p222
      %p470 = pneg %p246
      %p471 = pneg %p243
      %p472 = pneg %p267
      %p473 = pneg %p264
      %p474 = pneg %p288
      %p475 = pneg %p285
      %p476 = pneg %p309
      %p477 = pneg %p306
      %p478 = pneg %p335
      %p479 = pneg %p332
      %p480 = scmp.lt.s32.totalorder %s26, 1
      %s481 = scalar_select %p480, %s26, 1
      %s482 = smul.addr %s481, 8
      %s483 = scalar_lea.vmem %s13, %s482
      %p484 = pneg %p361
      %p485 = pneg %p358
      %p486 = scmp.lt.s32.totalorder %s26, 1
      %s487 = scalar_select %p486, %s26, 1
      %s488 = smul.addr %s487, 8
      %s489 = scalar_lea.vmem %s14, %s488
      %p490 = scmp.lt.s32.totalorder %s26, 1
      %s491 = scalar_select %p490, %s26, 1
      %s492 = smul.addr %s491, 4
      %s493 = smul.addr %s492, 4
      %s494 = scalar_lea.vmem %s0, %s493
      %p495 = scmp.lt.s32.totalorder %s26, 1
      %s496 = scalar_select %p495, %s26, 1
      %s497 = smul.addr %s496, 4
      %s498 = scalar_lea.vmem %s1, %s497
      %p499 = scmp.lt.s32.totalorder %s26, 1
      %s500 = scalar_select %p499, %s26, 1
      %s501 = smul.addr %s500, 8
      %s502 = scalar_lea.vmem %s2, %s501
      %p503 = scmp.lt.s32.totalorder %s26, 1
      %s504 = scalar_select %p503, %s26, 1
      %s505 = smul.addr %s504, 8
      %s506 = scalar_lea.vmem %s13, %s505
      %p507 = scmp.lt.s32.totalorder %s26, 1
      %s508 = scalar_select %p507, %s26, 1
      %s509 = smul.addr %s508, 8
      %s510 = scalar_lea.vmem %s14, %s509
      %vm512 = vcmask 31744
      %513 = vst.msk [vmem:[#allocation2] sm:$0xff] %vm512, 0.0
      %514 = vst.msk [vmem:[#allocation2 + $0x10] sm:$0xff] %vm512, 0.0
      %515 = vst.msk [vmem:[#allocation2 + $0x20] sm:$0xff] %vm512, 0.0
      %516 = vst.msk [vmem:[#allocation2 + $0x30] sm:$0xff] %vm512, 0.0
      %vm517 = vcmask 64544
      %518 = vst.msk [vmem:[#allocation2 + $0x8] sm:$0xff] %vm517, 0.0
      %519 = vst.msk [vmem:[#allocation2 + $0x18] sm:$0xff] %vm517, 0.0
      %520 = vst.msk [vmem:[#allocation2 + $0x28] sm:$0xff] %vm517, 0.0
      %521 = vst.msk [vmem:[#allocation2 + $0x38] sm:$0xff] %vm517, 0.0
      %v522 = vld [vmem:[%s3] sm:$0xf]
      %v523 = vld [vmem:[%s3 + $0x4] sm:$0xf]
      %v524 = vld [vmem:[%s3 + $0x8] sm:$0xf]
      %v525 = vld [vmem:[%s3 + $0xc] sm:$0xf]
      %v526 = vld [vmem:[%s494] sm:$0xf]
      %v527 = vld [vmem:[%s494 + $0x4] sm:$0xf]
      %v528 = vld [vmem:[%s494 + $0x8] sm:$0xf]
      %v529 = vld [vmem:[%s494 + $0xc] sm:$0xf]
      %v530 = vld [vmem:[%s4] sm:$0xff]
      %v531 = vld [vmem:[%s4 + $0x8] sm:$0xff]
      %v532 = vld [vmem:[%s4 + $0x10] sm:$0xff]
      %v533 = vld [vmem:[%s4 + $0x18] sm:$0xff]
      %535 = vset.pattern.permute.xlu0 0
      %536 = vperm.xlu0 %535, %v530
      %v537 = vpop.permute.xlu0 %536
      %540 = vset.pattern.permute.xlu0 0
      %541 = vperm.xlu0 %540, %v531
      %v542 = vpop.permute.xlu0 %541
      %545 = vset.pattern.permute.xlu0 0
      %546 = vperm.xlu0 %545, %v532
      %v547 = vpop.permute.xlu0 %546
      %550 = vset.pattern.permute.xlu0 0
      %551 = vperm.xlu0 %550, %v533
      %v552 = vpop.permute.xlu0 %551
      %v558 = vunpack.c.l.b16 %v522
      %v559 = vunpack.c.l.b16 %v523
      %v560 = vunpack.c.l.b16 %v524
      %v561 = vunpack.c.l.b16 %v525
      %v562 = vpack.c.b16 %v559, %v558
      %v563 = vpack.c.b16 %v561, %v560
      %v568 = vunpack.c.l.b16 %v526
      %v569 = vunpack.c.l.b16 %v527
      %v570 = vunpack.c.l.b16 %v528
      %v571 = vunpack.c.l.b16 %v529
      %v572 = vpack.c.b16 %v569, %v568
      %v573 = vpack.c.b16 %v571, %v570
      %vm576 = vcmask 261120
      %v578 = vsel %vm576, %v562, 0
      %v581 = vsel %vm576, %v563, 0
      %583 = vmatprep.subr.bf16.mxu0 0
      %584 = vmatpush1.bf16.msra.mxu0 %v572
      %585 = vmatprep.subr.bf16.mxu0 0
      %586 = vmatpush1.bf16.msra.mxu0 %v573
      %587 = vmatprep.subr.bf16.mxu0 0
      %588 = vmatpush1.bf16.msra.mxu0 0
      %589 = vmatprep.subr.bf16.mxu0 0
      %590 = vmatpush1.bf16.msra.mxu0 0
      %591 = vmatprep.subr.bf16.mxu0 0
      %592 = vmatpush1.bf16.msra.mxu0 0
      %593 = vmatprep.subr.bf16.mxu0 0
      %594 = vmatpush1.bf16.msra.mxu0 0
      %595 = vmatprep.subr.bf16.mxu0 0
      %596 = vmatpush1.bf16.msra.mxu0 0
      %597 = vmatprep.subr.bf16.mxu0 0
      %598 = vmatpush1.bf16.msra.mxu0 0
      %599 = vmatprep.subr.bf16.mxu0 0
      %600 = vmatpush1.bf16.msra.mxu0 0
      %601 = vmatprep.subr.bf16.mxu0 0
      %602 = vmatpush1.bf16.msra.mxu0 0
      %603 = vmatprep.subr.bf16.mxu0 0
      %604 = vmatpush1.bf16.msra.mxu0 0
      %605 = vmatprep.subr.bf16.mxu0 0
      %606 = vmatpush1.bf16.msra.mxu0 0
      %607 = vmatprep.subr.bf16.mxu0 0
      %608 = vmatpush1.bf16.msra.mxu0 0
      %609 = vmatprep.subr.bf16.mxu0 0
      %610 = vmatpush1.bf16.msra.mxu0 0
      %611 = vmatprep.subr.bf16.mxu0 0
      %612 = vmatpush1.bf16.msra.mxu0 0
      %613 = vmatprep.subr.bf16.mxu0 0
      %614 = vmatpush1.bf16.msra.mxu0 0
      %615 = vmatprep.mubr.bf16.mxu0 0
      %616 = vmatmul.mubr.bf16.gmra.mrb[0].mxu0 %v578
      %v617 = vpop.f32.mrb[0].mxu0
      %v618 = vadd.f32 %v537, %v617
      %v619 = vpop.f32.mrb[0].mxu0
      %v620 = vpop.f32.mrb[0].mxu0
      %v621 = vadd.f32 %v542, %v620
      %v622 = vpop.f32.mrb[0].mxu0
      %623 = vmatprep.mubr.bf16.mxu0 0
      %624 = vmatmul.mubr.bf16.gmra.mrb[0].mxu0 %v581
      %v625 = vpop.f32.mrb[0].mxu0
      %v626 = vadd.f32 %v547, %v625
      %v627 = vpop.f32.mrb[0].mxu0
      %v628 = vpop.f32.mrb[0].mxu0
      %v629 = vadd.f32 %v552, %v628
      %v630 = vpop.f32.mrb[0].mxu0
      %631 = vdwg.mxu0
      %v632 = vmax.f32 %v618, 0.0
      %v633 = vmax.f32 %v621, 0.0
      %v634 = vmax.f32 %v626, 0.0
      %v635 = vmax.f32 %v629, 0.0
      %640 = vrot.lane.b32.xlu0 %v632, 4
      %v641 = vpop.permute.xlu0 %640
      %642 = vrot.lane.b32.xlu0 %v633, 4
      %v643 = vpop.permute.xlu0 %642
      %644 = vrot.lane.b32.xlu0 %v634, 4
      %v645 = vpop.permute.xlu0 %644
      %646 = vrot.lane.b32.xlu0 %v635, 4
      %v647 = vpop.permute.xlu0 %646
      %vm652 = vcmask 1047584
      %653 = vst.msk [vmem:[#allocation2] sm:$0xff] %vm652, %v641
      %654 = vst.msk [vmem:[#allocation2 + $0x8] sm:$0xff] %vm512, %v641
      %655 = vst.msk [vmem:[#allocation2 + $0x10] sm:$0xff] %vm652, %v643
      %656 = vst.msk [vmem:[#allocation2 + $0x18] sm:$0xff] %vm512, %v643
      %657 = vst.msk [vmem:[#allocation2 + $0x20] sm:$0xff] %vm652, %v645
      %658 = vst.msk [vmem:[#allocation2 + $0x28] sm:$0xff] %vm512, %v645
      %659 = vst.msk [vmem:[#allocation2 + $0x30] sm:$0xff] %vm652, %v647
      %660 = vst.msk [vmem:[#allocation2 + $0x38] sm:$0xff] %vm512, %v647
      %v661 = vld [vmem:[#allocation2] sm:$0xff]
      %v662 = vld [vmem:[#allocation2 + $0x8] sm:$0xff]
      %v663 = vld [vmem:[#allocation2 + $0x10] sm:$0xff]
      %v664 = vld [vmem:[#allocation2 + $0x18] sm:$0xff]
      %v665 = vld [vmem:[#allocation2 + $0x20] sm:$0xff]
      %v666 = vld [vmem:[#allocation2 + $0x28] sm:$0xff]
      %v667 = vld [vmem:[#allocation2 + $0x30] sm:$0xff]
      %v668 = vld [vmem:[#allocation2 + $0x38] sm:$0xff]
      %v669 = vpack.c.bf16 %v663, %v661
      %v670 = vpack.c.bf16 %v664, %v662
      %v671 = vpack.c.bf16 %v667, %v665
      %v672 = vpack.c.bf16 %v668, %v666
      %677 = vrot.lane.b32.xlu0 %v669, 126
      %v678 = vpop.permute.xlu0 %677
      %679 = vrot.lane.b32.xlu0 %v670, 126
      %v680 = vpop.permute.xlu0 %679
      %681 = vrot.lane.b32.xlu0 %v671, 126
      %v682 = vpop.permute.xlu0 %681
      %683 = vrot.lane.b32.xlu0 %v672, 126
      %v684 = vpop.permute.xlu0 %683
      %vm685 = vcmask 1031168
      %v686 = vsel %vm685, %v678, %v680
      %v687 = vsel %vm685, %v682, %v684
      %688 = vrot.lane.b32.xlu0 %v669, 124
      %v689 = vpop.permute.xlu0 %688
      %690 = vrot.lane.b32.xlu0 %v670, 124
      %v691 = vpop.permute.xlu0 %690
      %692 = vrot.lane.b32.xlu0 %v671, 124
      %v693 = vpop.permute.xlu0 %692
      %694 = vrot.lane.b32.xlu0 %v672, 124
      %v695 = vpop.permute.xlu0 %694
      %vm696 = vcmask 1014784
      %v697 = vsel %vm696, %v689, %v691
      %v698 = vsel %vm696, %v693, %v695
      %v699 = vld [vmem:[%s5] sm:$0xf]
      %v700 = vld [vmem:[%s5 + $0x4] sm:$0xf]
      %v701 = vld [vmem:[%s5 + $0x8] sm:$0xf]
      %v702 = vld [vmem:[%s5 + $0xc] sm:$0xf]
      %v703 = vld [vmem:[%s6] sm:$0xff]
      %v704 = vld [vmem:[%s6 + $0x8] sm:$0xff]
      %v705 = vld [vmem:[%s6 + $0x10] sm:$0xff]
      %v706 = vld [vmem:[%s6 + $0x18] sm:$0xff]
      %708 = vset.pattern.permute.xlu0 0
      %709 = vperm.xlu0 %708, %v703
      %v710 = vpop.permute.xlu0 %709
      %713 = vset.pattern.permute.xlu0 0
      %714 = vperm.xlu0 %713, %v704
      %v715 = vpop.permute.xlu0 %714
      %718 = vset.pattern.permute.xlu0 0
      %719 = vperm.xlu0 %718, %v705
      %v720 = vpop.permute.xlu0 %719
      %723 = vset.pattern.permute.xlu0 0
      %724 = vperm.xlu0 %723, %v706
      %v725 = vpop.permute.xlu0 %724
      %v731 = vunpack.c.l.b16 %v699
      %v732 = vunpack.c.l.b16 %v700
      %v733 = vunpack.c.l.b16 %v701
      %v734 = vunpack.c.l.b16 %v702
      %v735 = vpack.c.b16 %v732, %v731
      %v736 = vpack.c.b16 %v734, %v733
      %737 = vrot.lane.b32.xlu0 %v686, 126
      %v738 = vpop.permute.xlu0 %737
      %739 = vrot.lane.b32.xlu0 %v680, 126
      %v740 = vpop.permute.xlu0 %739
      %741 = vrot.lane.b32.xlu0 %v687, 126
      %v742 = vpop.permute.xlu0 %741
      %743 = vrot.lane.b32.xlu0 %v684, 126
      %v744 = vpop.permute.xlu0 %743
      %745 = vrot.lane.b32.xlu0 %v697, 126
      %v746 = vpop.permute.xlu0 %745
      %747 = vrot.lane.b32.xlu0 %v691, 126
      %v748 = vpop.permute.xlu0 %747
      %749 = vrot.lane.b32.xlu0 %v698, 126
      %v750 = vpop.permute.xlu0 %749
      %751 = vrot.lane.b32.xlu0 %v695, 126
      %v752 = vpop.permute.xlu0 %751
      %v753 = vsel %vm685, %v738, %v740
      %v754 = vsel %vm685, %v742, %v744
      %v755 = vsel %vm685, %v746, %v748
      %v756 = vsel %vm685, %v750, %v752
      %vm763 = vcmask 785408
      %v765 = vsel %vm763, %v735, 0
      %v768 = vsel %vm763, %v736, 0
      %770 = vmatprep.subr.bf16.mxu0 0
      %771 = vmatpush1.bf16.msra.mxu0 %v686
      %772 = vmatprep.subr.bf16.mxu0 0
      %773 = vmatpush1.bf16.msra.mxu0 %v687
      %774 = vmatprep.subr.bf16.mxu0 0
      %775 = vmatpush1.bf16.msra.mxu0 %v753
      %776 = vmatprep.subr.bf16.mxu0 0
      %777 = vmatpush1.bf16.msra.mxu0 %v754
      %778 = vmatprep.subr.bf16.mxu0 0
      %779 = vmatpush1.bf16.msra.mxu0 %v755
      %780 = vmatprep.subr.bf16.mxu0 0
      %781 = vmatpush1.bf16.msra.mxu0 %v756
      %782 = vmatprep.subr.bf16.mxu0 0
      %783 = vmatpush1.bf16.msra.mxu0 0
      %784 = vmatprep.subr.bf16.mxu0 0
      %785 = vmatpush1.bf16.msra.mxu0 0
      %786 = vmatprep.subr.bf16.mxu0 0
      %787 = vmatpush1.bf16.msra.mxu0 0
      %788 = vmatprep.subr.bf16.mxu0 0
      %789 = vmatpush1.bf16.msra.mxu0 0
      %790 = vmatprep.subr.bf16.mxu0 0
      %791 = vmatpush1.bf16.msra.mxu0 0
      %792 = vmatprep.subr.bf16.mxu0 0
      %793 = vmatpush1.bf16.msra.mxu0 0
      %794 = vmatprep.subr.bf16.mxu0 0
      %795 = vmatpush1.bf16.msra.mxu0 0
      %796 = vmatprep.subr.bf16.mxu0 0
      %797 = vmatpush1.bf16.msra.mxu0 0
      %798 = vmatprep.subr.bf16.mxu0 0
      %799 = vmatpush1.bf16.msra.mxu0 0
      %800 = vmatprep.subr.bf16.mxu0 0
      %801 = vmatpush1.bf16.msra.mxu0 0
      %802 = vmatprep.mubr.bf16.mxu0 0
      %803 = vmatmul.mubr.bf16.gmra.mrb[0].mxu0 %v765
      %v804 = vpop.f32.mrb[0].mxu0
      %v805 = vadd.f32 %v710, %v804
      %v806 = vpop.f32.mrb[0].mxu0
      %v807 = vpop.f32.mrb[0].mxu0
      %v808 = vadd.f32 %v715, %v807
      %v809 = vpop.f32.mrb[0].mxu0
      %810 = vmatprep.mubr.bf16.mxu0 0
      %811 = vmatmul.mubr.bf16.gmra.mrb[0].mxu0 %v768
      %v812 = vpop.f32.mrb[0].mxu0
      %v813 = vadd.f32 %v720, %v812
      %v814 = vpop.f32.mrb[0].mxu0
      %v815 = vpop.f32.mrb[0].mxu0
      %v816 = vadd.f32 %v725, %v815
      %v817 = vpop.f32.mrb[0].mxu0
      %818 = vdwg.mxu0
      %v819 = vmax.f32 %v805, 0.0
      %v820 = vmax.f32 %v808, 0.0
      %v821 = vmax.f32 %v813, 0.0
      %v822 = vmax.f32 %v816, 0.0
      %827 = vrot.lane.b32.xlu0 %v819, 4
      %v828 = vpop.permute.xlu0 %827
      %829 = vrot.lane.b32.xlu0 %v820, 4
      %v830 = vpop.permute.xlu0 %829
      %831 = vrot.lane.b32.xlu0 %v821, 4
      %v832 = vpop.permute.xlu0 %831
      %833 = vrot.lane.b32.xlu0 %v822, 4
      %v834 = vpop.permute.xlu0 %833
      %v839 = vadd.f32 %v661, %v828
      %v840 = vadd.f32 %v662, %v828
      %v841 = vadd.f32 %v663, %v830
      %v842 = vadd.f32 %v664, %v830
      %v843 = vadd.f32 %v665, %v832
      %v844 = vadd.f32 %v666, %v832
      %v845 = vadd.f32 %v667, %v834
      %v846 = vadd.f32 %v668, %v834
      %847 = vst.msk [vmem:[#allocation2] sm:$0xff] %vm652, %v839
      %848 = vst.msk [vmem:[#allocation2 + $0x8] sm:$0xff] %vm512, %v840
      %849 = vst.msk [vmem:[#allocation2 + $0x10] sm:$0xff] %vm652, %v841
      %850 = vst.msk [vmem:[#allocation2 + $0x18] sm:$0xff] %vm512, %v842
      %851 = vst.msk [vmem:[#allocation2 + $0x20] sm:$0xff] %vm652, %v843
      %852 = vst.msk [vmem:[#allocation2 + $0x28] sm:$0xff] %vm512, %v844
      %853 = vst.msk [vmem:[#allocation2 + $0x30] sm:$0xff] %vm652, %v845
      %854 = vst.msk [vmem:[#allocation2 + $0x38] sm:$0xff] %vm512, %v846
      %v855 = vld [vmem:[#allocation2] sm:$0xff]
      %v856 = vld [vmem:[#allocation2 + $0x10] sm:$0xff]
      %v857 = vld [vmem:[#allocation2 + $0x20] sm:$0xff]
      %v858 = vld [vmem:[#allocation2 + $0x30] sm:$0xff]
      %v859 = vpack.c.bf16 %v856, %v855
      %v860 = vpack.c.bf16 %v858, %v857
      %v861 = vld [vmem:[#allocation2 + $0x8] sm:$0xff]
      %v862 = vld [vmem:[#allocation2 + $0x18] sm:$0xff]
      %v863 = vld [vmem:[#allocation2 + $0x28] sm:$0xff]
      %v864 = vld [vmem:[#allocation2 + $0x38] sm:$0xff]
      %v865 = vpack.c.bf16 %v862, %v861
      %v866 = vpack.c.bf16 %v864, %v863
      %871 = vrot.lane.b32.xlu0 %v859, 124
      %v872 = vpop.permute.xlu0 %871
      %873 = vrot.lane.b32.xlu0 %v865, 124
      %v874 = vpop.permute.xlu0 %873
      %875 = vrot.lane.b32.xlu0 %v860, 124
      %v876 = vpop.permute.xlu0 %875
      %877 = vrot.lane.b32.xlu0 %v866, 124
      %v878 = vpop.permute.xlu0 %877
      %v879 = vsel %vm696, %v872, %v874
      %v880 = vsel %vm696, %v876, %v878
      %883 = vrot.lane.b32.xlu0 %v859, 120
      %v884 = vpop.permute.xlu0 %883
      %885 = vrot.lane.b32.xlu0 %v865, 120
      %v886 = vpop.permute.xlu0 %885
      %887 = vrot.lane.b32.xlu0 %v860, 120
      %v888 = vpop.permute.xlu0 %887
      %889 = vrot.lane.b32.xlu0 %v866, 120
      %v890 = vpop.permute.xlu0 %889
      %vm891 = vcmask 982016
      %v892 = vsel %vm891, %v884, %v886
      %v893 = vsel %vm891, %v888, %v890
      %v896 = vld [vmem:[%s7] sm:$0xf]
      %v897 = vld [vmem:[%s7 + $0x4] sm:$0xf]
      %v898 = vld [vmem:[%s7 + $0x8] sm:$0xf]
      %v899 = vld [vmem:[%s7 + $0xc] sm:$0xf]
      %v900 = vld [vmem:[%s8] sm:$0xff]
      %v901 = vld [vmem:[%s8 + $0x8] sm:$0xff]
      %v902 = vld [vmem:[%s8 + $0x10] sm:$0xff]
      %v903 = vld [vmem:[%s8 + $0x18] sm:$0xff]
      %905 = vset.pattern.permute.xlu0 0
      %906 = vperm.xlu0 %905, %v900
      %v907 = vpop.permute.xlu0 %906
      %910 = vset.pattern.permute.xlu0 0
      %911 = vperm.xlu0 %910, %v901
      %v912 = vpop.permute.xlu0 %911
      %915 = vset.pattern.permute.xlu0 0
      %916 = vperm.xlu0 %915, %v902
      %v917 = vpop.permute.xlu0 %916
      %920 = vset.pattern.permute.xlu0 0
      %921 = vperm.xlu0 %920, %v903
      %v922 = vpop.permute.xlu0 %921
      %v928 = vunpack.c.l.b16 %v896
      %v929 = vunpack.c.l.b16 %v897
      %v930 = vunpack.c.l.b16 %v898
      %v931 = vunpack.c.l.b16 %v899
      %v932 = vpack.c.b16 %v929, %v928
      %v933 = vpack.c.b16 %v931, %v930
      %v935 = vsel %vm763, %v932, 0
      %v938 = vsel %vm763, %v933, 0
      %940 = vmatprep.subr.bf16.mxu0 0
      %941 = vmatpush1.bf16.msra.mxu0 %v859
      %942 = vmatprep.subr.bf16.mxu0 0
      %943 = vmatpush1.bf16.msra.mxu0 %v860
      %944 = vmatprep.subr.bf16.mxu0 0
      %945 = vmatpush1.bf16.msra.mxu0 %v879
      %946 = vmatprep.subr.bf16.mxu0 0
      %947 = vmatpush1.bf16.msra.mxu0 %v880
      %948 = vmatprep.subr.bf16.mxu0 0
      %949 = vmatpush1.bf16.msra.mxu0 %v892
      %950 = vmatprep.subr.bf16.mxu0 0
      %951 = vmatpush1.bf16.msra.mxu0 %v893
      %952 = vmatprep.subr.bf16.mxu0 0
      %953 = vmatpush1.bf16.msra.mxu0 0
      %954 = vmatprep.subr.bf16.mxu0 0
      %955 = vmatpush1.bf16.msra.mxu0 0
      %956 = vmatprep.subr.bf16.mxu0 0
      %957 = vmatpush1.bf16.msra.mxu0 0
      %958 = vmatprep.subr.bf16.mxu0 0
      %959 = vmatpush1.bf16.msra.mxu0 0
      %960 = vmatprep.subr.bf16.mxu0 0
      %961 = vmatpush1.bf16.msra.mxu0 0
      %962 = vmatprep.subr.bf16.mxu0 0
      %963 = vmatpush1.bf16.msra.mxu0 0
      %964 = vmatprep.subr.bf16.mxu0 0
      %965 = vmatpush1.bf16.msra.mxu0 0
      %966 = vmatprep.subr.bf16.mxu0 0
      %967 = vmatpush1.bf16.msra.mxu0 0
      %968 = vmatprep.subr.bf16.mxu0 0
      %969 = vmatpush1.bf16.msra.mxu0 0
      %970 = vmatprep.subr.bf16.mxu0 0
      %971 = vmatpush1.bf16.msra.mxu0 0
      %972 = vmatprep.mubr.bf16.mxu0 0
      %973 = vmatmul.mubr.bf16.gmra.mrb[0].mxu0 %v935
      %v974 = vpop.f32.mrb[0].mxu0
      %v975 = vadd.f32 %v907, %v974
      %v976 = vpop.f32.mrb[0].mxu0
      %v977 = vpop.f32.mrb[0].mxu0
      %v978 = vadd.f32 %v912, %v977
      %v979 = vpop.f32.mrb[0].mxu0
      %980 = vmatprep.mubr.bf16.mxu0 0
      %981 = vmatmul.mubr.bf16.gmra.mrb[0].mxu0 %v938
      %v982 = vpop.f32.mrb[0].mxu0
      %v983 = vadd.f32 %v917, %v982
      %v984 = vpop.f32.mrb[0].mxu0
      %v985 = vpop.f32.mrb[0].mxu0
      %v986 = vadd.f32 %v922, %v985
      %v987 = vpop.f32.mrb[0].mxu0
      %988 = vdwg.mxu0
      %v989 = vmax.f32 %v975, 0.0
      %v990 = vmax.f32 %v978, 0.0
      %v991 = vmax.f32 %v983, 0.0
      %v992 = vmax.f32 %v986, 0.0
      %v993 = vpack.c.bf16 %v990, %v989
      %v994 = vpack.c.bf16 %v992, %v991
      %v995 = vld [vmem:[%s11] sm:$0xf]
      %v996 = vld [vmem:[%s498] sm:$0xf]
      %v997 = vld [vmem:[%s9] sm:$0xf]
      %1000 = vrot.lane.b32.xlu0 %v993, 120
      %v1001 = vpop.permute.xlu0 %1000
      %1002 = vrot.lane.b32.xlu0 %v994, 120
      %v1003 = vpop.permute.xlu0 %1002
      %v1007 = vsel %vm576, %v997, 0
      %1009 = vmatprep.subr.bf16.mxu0 0
      %1010 = vmatpush1.bf16.msra.mxu0 %v1001
      %1011 = vmatprep.subr.bf16.mxu0 0
      %1012 = vmatpush1.bf16.msra.mxu0 %v1003
      %1013 = vmatprep.subr.bf16.mxu0 0
      %1014 = vmatpush1.bf16.msra.mxu0 0
      %1015 = vmatprep.subr.bf16.mxu0 0
      %1016 = vmatpush1.bf16.msra.mxu0 0
      %1017 = vmatprep.subr.bf16.mxu0 0
      %1018 = vmatpush1.bf16.msra.mxu0 0
      %1019 = vmatprep.subr.bf16.mxu0 0
      %1020 = vmatpush1.bf16.msra.mxu0 0
      %1021 = vmatprep.subr.bf16.mxu0 0
      %1022 = vmatpush1.bf16.msra.mxu0 0
      %1023 = vmatprep.subr.bf16.mxu0 0
      %1024 = vmatpush1.bf16.msra.mxu0 0
      %1025 = vmatprep.subr.bf16.mxu0 0
      %1026 = vmatpush1.bf16.msra.mxu0 0
      %1027 = vmatprep.subr.bf16.mxu0 0
      %1028 = vmatpush1.bf16.msra.mxu0 0
      %1029 = vmatprep.subr.bf16.mxu0 0
      %1030 = vmatpush1.bf16.msra.mxu0 0
      %1031 = vmatprep.subr.bf16.mxu0 0
      %1032 = vmatpush1.bf16.msra.mxu0 0
      %1033 = vmatprep.subr.bf16.mxu0 0
      %1034 = vmatpush1.bf16.msra.mxu0 0
      %1035 = vmatprep.subr.bf16.mxu0 0
      %1036 = vmatpush1.bf16.msra.mxu0 0
      %1037 = vmatprep.subr.bf16.mxu0 0
      %1038 = vmatpush1.bf16.msra.mxu0 0
      %1039 = vmatprep.subr.bf16.mxu0 0
      %1040 = vmatpush1.bf16.msra.mxu0 0
      %1041 = vmatprep.mubr.bf16.mxu0 0
      %1042 = vmatmul.mubr.bf16.gmra.mrb[0].mxu0 %v1007
      %v1043 = vpop.f32.mrb[0].mxu0
      %v1044 = vadd.f32 0.0, %v1043
      %v1045 = vpop.f32.mrb[0].mxu0
      %v1046 = vpop.f32.mrb[0].mxu0
      %v1047 = vpop.f32.mrb[0].mxu0
      %1048 = vdwg.mxu0
      %vm1049 = vcmask 64512
      %v1051 = vsel %vm1049, %v995, 0
      %vm1053 = vcmask 1043456
      %v1055 = vsel %vm1053, %v996, 0
      %1057 = vmatprep.subr.bf16.mxu0 0
      %1058 = vmatpush1.bf16.msra.mxu0 %v1055
      %1059 = vmatprep.subr.bf16.mxu0 0
      %1060 = vmatpush1.bf16.msra.mxu0 0
      %1061 = vmatprep.subr.bf16.mxu0 0
      %1062 = vmatpush1.bf16.msra.mxu0 0
      %1063 = vmatprep.subr.bf16.mxu0 0
      %1064 = vmatpush1.bf16.msra.mxu0 0
      %1065 = vmatprep.subr.bf16.mxu0 0
      %1066 = vmatpush1.bf16.msra.mxu0 0
      %1067 = vmatprep.subr.bf16.mxu0 0
      %1068 = vmatpush1.bf16.msra.mxu0 0
      %1069 = vmatprep.subr.bf16.mxu0 0
      %1070 = vmatpush1.bf16.msra.mxu0 0
      %1071 = vmatprep.subr.bf16.mxu0 0
      %1072 = vmatpush1.bf16.msra.mxu0 0
      %1073 = vmatprep.subr.bf16.mxu0 0
      %1074 = vmatpush1.bf16.msra.mxu0 0
      %1075 = vmatprep.subr.bf16.mxu0 0
      %1076 = vmatpush1.bf16.msra.mxu0 0
      %1077 = vmatprep.subr.bf16.mxu0 0
      %1078 = vmatpush1.bf16.msra.mxu0 0
      %1079 = vmatprep.subr.bf16.mxu0 0
      %1080 = vmatpush1.bf16.msra.mxu0 0
      %1081 = vmatprep.subr.bf16.mxu0 0
      %1082 = vmatpush1.bf16.msra.mxu0 0
      %1083 = vmatprep.subr.bf16.mxu0 0
      %1084 = vmatpush1.bf16.msra.mxu0 0
      %1085 = vmatprep.subr.bf16.mxu0 0
      %1086 = vmatpush1.bf16.msra.mxu0 0
      %1087 = vmatprep.subr.bf16.mxu0 0
      %1088 = vmatpush1.bf16.msra.mxu0 0
      %1089 = vmatprep.mubr.bf16.mxu0 0
      %1090 = vmatmul.mubr.bf16.gmra.mrb[0].mxu0 %v1051
      %v1091 = vpop.f32.mrb[0].mxu0
      %v1092 = vadd.f32 %v1044, %v1091
      %v1093 = vpop.f32.mrb[0].mxu0
      %v1094 = vpop.f32.mrb[0].mxu0
      %v1095 = vpop.f32.mrb[0].mxu0
      %1096 = vdwg.mxu0
      %s1097 = scalar_lea.vmem %s9, 4
      %v1098 = vld [vmem:[%s1097] sm:$0xf]
      %1099 = vrot.lane.b32.xlu0 %v993, 119
      %v1100 = vpop.permute.xlu0 %1099
      %1101 = vrot.lane.b32.xlu0 %v994, 119
      %v1102 = vpop.permute.xlu0 %1101
      %v1106 = vsel %vm576, %v1098, 0
      %1108 = vmatprep.subr.bf16.mxu0 0
      %1109 = vmatpush1.bf16.msra.mxu0 %v1100
      %1110 = vmatprep.subr.bf16.mxu0 0
      %1111 = vmatpush1.bf16.msra.mxu0 %v1102
      %1112 = vmatprep.subr.bf16.mxu0 0
      %1113 = vmatpush1.bf16.msra.mxu0 0
      %1114 = vmatprep.subr.bf16.mxu0 0
      %1115 = vmatpush1.bf16.msra.mxu0 0
      %1116 = vmatprep.subr.bf16.mxu0 0
      %1117 = vmatpush1.bf16.msra.mxu0 0
      %1118 = vmatprep.subr.bf16.mxu0 0
      %1119 = vmatpush1.bf16.msra.mxu0 0
      %1120 = vmatprep.subr.bf16.mxu0 0
      %1121 = vmatpush1.bf16.msra.mxu0 0
      %1122 = vmatprep.subr.bf16.mxu0 0
      %1123 = vmatpush1.bf16.msra.mxu0 0
      %1124 = vmatprep.subr.bf16.mxu0 0
      %1125 = vmatpush1.bf16.msra.mxu0 0
      %1126 = vmatprep.subr.bf16.mxu0 0
      %1127 = vmatpush1.bf16.msra.mxu0 0
      %1128 = vmatprep.subr.bf16.mxu0 0
      %1129 = vmatpush1.bf16.msra.mxu0 0
      %1130 = vmatprep.subr.bf16.mxu0 0
      %1131 = vmatpush1.bf16.msra.mxu0 0
      %1132 = vmatprep.subr.bf16.mxu0 0
      %1133 = vmatpush1.bf16.msra.mxu0 0
      %1134 = vmatprep.subr.bf16.mxu0 0
      %1135 = vmatpush1.bf16.msra.mxu0 0
      %1136 = vmatprep.subr.bf16.mxu0 0
      %1137 = vmatpush1.bf16.msra.mxu0 0
      %1138 = vmatprep.subr.bf16.mxu0 0
      %1139 = vmatpush1.bf16.msra.mxu0 0
      %1140 = vmatprep.mubr.bf16.mxu0 0
      %1141 = vmatmul.mubr.bf16.gmra.mrb[0].mxu0 %v1106
      %v1142 = vpop.f32.mrb[0].mxu0
      %v1143 = vadd.f32 0.0, %v1142
      %v1144 = vpop.f32.mrb[0].mxu0
      %v1145 = vpop.f32.mrb[0].mxu0
      %v1146 = vpop.f32.mrb[0].mxu0
      %1147 = vdwg.mxu0
      %v1148 = vadd.f32 %v1092, %v1143
      %s1149 = scalar_lea.vmem %s9, 8
      %v1150 = vld [vmem:[%s1149] sm:$0xf]
      %1151 = vrot.lane.b32.xlu0 %v993, 118
      %v1152 = vpop.permute.xlu0 %1151
      %1153 = vrot.lane.b32.xlu0 %v994, 118
      %v1154 = vpop.permute.xlu0 %1153
      %v1158 = vsel %vm576, %v1150, 0
      %1160 = vmatprep.subr.bf16.mxu0 0
      %1161 = vmatpush1.bf16.msra.mxu0 %v1152
      %1162 = vmatprep.subr.bf16.mxu0 0
      %1163 = vmatpush1.bf16.msra.mxu0 %v1154
      %1164 = vmatprep.subr.bf16.mxu0 0
      %1165 = vmatpush1.bf16.msra.mxu0 0
      %1166 = vmatprep.subr.bf16.mxu0 0
      %1167 = vmatpush1.bf16.msra.mxu0 0
      %1168 = vmatprep.subr.bf16.mxu0 0
      %1169 = vmatpush1.bf16.msra.mxu0 0
      %1170 = vmatprep.subr.bf16.mxu0 0
      %1171 = vmatpush1.bf16.msra.mxu0 0
      %1172 = vmatprep.subr.bf16.mxu0 0
      %1173 = vmatpush1.bf16.msra.mxu0 0
      %1174 = vmatprep.subr.bf16.mxu0 0
      %1175 = vmatpush1.bf16.msra.mxu0 0
      %1176 = vmatprep.subr.bf16.mxu0 0
      %1177 = vmatpush1.bf16.msra.mxu0 0
      %1178 = vmatprep.subr.bf16.mxu0 0
      %1179 = vmatpush1.bf16.msra.mxu0 0
      %1180 = vmatprep.subr.bf16.mxu0 0
      %1181 = vmatpush1.bf16.msra.mxu0 0
      %1182 = vmatprep.subr.bf16.mxu0 0
      %1183 = vmatpush1.bf16.msra.mxu0 0
      %1184 = vmatprep.subr.bf16.mxu0 0
      %1185 = vmatpush1.bf16.msra.mxu0 0
      %1186 = vmatprep.subr.bf16.mxu0 0
      %1187 = vmatpush1.bf16.msra.mxu0 0
      %1188 = vmatprep.subr.bf16.mxu0 0
      %1189 = vmatpush1.bf16.msra.mxu0 0
      %1190 = vmatprep.subr.bf16.mxu0 0
      %1191 = vmatpush1.bf16.msra.mxu0 0
      %1192 = vmatprep.mubr.bf16.mxu0 0
      %1193 = vmatmul.mubr.bf16.gmra.mrb[0].mxu0 %v1158
      %v1194 = vpop.f32.mrb[0].mxu0
      %v1195 = vadd.f32 0.0, %v1194
      %v1196 = vpop.f32.mrb[0].mxu0
      %v1197 = vpop.f32.mrb[0].mxu0
      %v1198 = vpop.f32.mrb[0].mxu0
      %1199 = vdwg.mxu0
      %v1200 = vadd.f32 %v1148, %v1195
      %s1201 = scalar_lea.vmem %s9, 12
      %v1202 = vld [vmem:[%s1201] sm:$0xf]
      %1203 = vrot.lane.b32.xlu0 %v993, 117
      %v1204 = vpop.permute.xlu0 %1203
      %1205 = vrot.lane.b32.xlu0 %v994, 117
      %v1206 = vpop.permute.xlu0 %1205
      %v1210 = vsel %vm576, %v1202, 0
      %1212 = vmatprep.subr.bf16.mxu0 0
      %1213 = vmatpush1.bf16.msra.mxu0 %v1204
      %1214 = vmatprep.subr.bf16.mxu0 0
      %1215 = vmatpush1.bf16.msra.mxu0 %v1206
      %1216 = vmatprep.subr.bf16.mxu0 0
      %1217 = vmatpush1.bf16.msra.mxu0 0
      %1218 = vmatprep.subr.bf16.mxu0 0
      %1219 = vmatpush1.bf16.msra.mxu0 0
      %1220 = vmatprep.subr.bf16.mxu0 0
      %1221 = vmatpush1.bf16.msra.mxu0 0
      %1222 = vmatprep.subr.bf16.mxu0 0
      %1223 = vmatpush1.bf16.msra.mxu0 0
      %1224 = vmatprep.subr.bf16.mxu0 0
      %1225 = vmatpush1.bf16.msra.mxu0 0
      %1226 = vmatprep.subr.bf16.mxu0 0
      %1227 = vmatpush1.bf16.msra.mxu0 0
      %1228 = vmatprep.subr.bf16.mxu0 0
      %1229 = vmatpush1.bf16.msra.mxu0 0
      %1230 = vmatprep.subr.bf16.mxu0 0
      %1231 = vmatpush1.bf16.msra.mxu0 0
      %1232 = vmatprep.subr.bf16.mxu0 0
      %1233 = vmatpush1.bf16.msra.mxu0 0
      %1234 = vmatprep.subr.bf16.mxu0 0
      %1235 = vmatpush1.bf16.msra.mxu0 0
      %1236 = vmatprep.subr.bf16.mxu0 0
      %1237 = vmatpush1.bf16.msra.mxu0 0
      %1238 = vmatprep.subr.bf16.mxu0 0
      %1239 = vmatpush1.bf16.msra.mxu0 0
      %1240 = vmatprep.subr.bf16.mxu0 0
      %1241 = vmatpush1.bf16.msra.mxu0 0
      %1242 = vmatprep.subr.bf16.mxu0 0
      %1243 = vmatpush1.bf16.msra.mxu0 0
      %1244 = vmatprep.mubr.bf16.mxu0 0
      %1245 = vmatmul.mubr.bf16.gmra.mrb[0].mxu0 %v1210
      %v1246 = vpop.f32.mrb[0].mxu0
      %v1247 = vadd.f32 0.0, %v1246
      %v1248 = vpop.f32.mrb[0].mxu0
      %v1249 = vpop.f32.mrb[0].mxu0
      %v1250 = vpop.f32.mrb[0].mxu0
      %1251 = vdwg.mxu0
      %v1252 = vadd.f32 %v1200, %v1247
      %s1253 = scalar_lea.vmem %s9, 16
      %v1254 = vld [vmem:[%s1253] sm:$0xf]
      %1255 = vrot.lane.b32.xlu0 %v993, 116
      %v1256 = vpop.permute.xlu0 %1255
      %1257 = vrot.lane.b32.xlu0 %v994, 116
      %v1258 = vpop.permute.xlu0 %1257
      %v1262 = vsel %vm576, %v1254, 0
      %1264 = vmatprep.subr.bf16.mxu0 0
      %1265 = vmatpush1.bf16.msra.mxu0 %v1256
      %1266 = vmatprep.subr.bf16.mxu0 0
      %1267 = vmatpush1.bf16.msra.mxu0 %v1258
      %1268 = vmatprep.subr.bf16.mxu0 0
      %1269 = vmatpush1.bf16.msra.mxu0 0
      %1270 = vmatprep.subr.bf16.mxu0 0
      %1271 = vmatpush1.bf16.msra.mxu0 0
      %1272 = vmatprep.subr.bf16.mxu0 0
      %1273 = vmatpush1.bf16.msra.mxu0 0
      %1274 = vmatprep.subr.bf16.mxu0 0
      %1275 = vmatpush1.bf16.msra.mxu0 0
      %1276 = vmatprep.subr.bf16.mxu0 0
      %1277 = vmatpush1.bf16.msra.mxu0 0
      %1278 = vmatprep.subr.bf16.mxu0 0
      %1279 = vmatpush1.bf16.msra.mxu0 0
      %1280 = vmatprep.subr.bf16.mxu0 0
      %1281 = vmatpush1.bf16.msra.mxu0 0
      %1282 = vmatprep.subr.bf16.mxu0 0
      %1283 = vmatpush1.bf16.msra.mxu0 0
      %1284 = vmatprep.subr.bf16.mxu0 0
      %1285 = vmatpush1.bf16.msra.mxu0 0
      %1286 = vmatprep.subr.bf16.mxu0 0
      %1287 = vmatpush1.bf16.msra.mxu0 0
      %1288 = vmatprep.subr.bf16.mxu0 0
      %1289 = vmatpush1.bf16.msra.mxu0 0
      %1290 = vmatprep.subr.bf16.mxu0 0
      %1291 = vmatpush1.bf16.msra.mxu0 0
      %1292 = vmatprep.subr.bf16.mxu0 0
      %1293 = vmatpush1.bf16.msra.mxu0 0
      %1294 = vmatprep.subr.bf16.mxu0 0
      %1295 = vmatpush1.bf16.msra.mxu0 0
      %1296 = vmatprep.mubr.bf16.mxu0 0
      %1297 = vmatmul.mubr.bf16.gmra.mrb[0].mxu0 %v1262
      %v1298 = vpop.f32.mrb[0].mxu0
      %v1299 = vadd.f32 0.0, %v1298
      %v1300 = vpop.f32.mrb[0].mxu0
      %v1301 = vpop.f32.mrb[0].mxu0
      %v1302 = vpop.f32.mrb[0].mxu0
      %1303 = vdwg.mxu0
      %v1304 = vadd.f32 %v1252, %v1299
      %s1305 = scalar_lea.vmem %s9, 20
      %v1306 = vld [vmem:[%s1305] sm:$0xf]
      %1307 = vrot.lane.b32.xlu0 %v993, 115
      %v1308 = vpop.permute.xlu0 %1307
      %1309 = vrot.lane.b32.xlu0 %v994, 115
      %v1310 = vpop.permute.xlu0 %1309
      %v1314 = vsel %vm576, %v1306, 0
      %1316 = vmatprep.subr.bf16.mxu0 0
      %1317 = vmatpush1.bf16.msra.mxu0 %v1308
      %1318 = vmatprep.subr.bf16.mxu0 0
      %1319 = vmatpush1.bf16.msra.mxu0 %v1310
      %1320 = vmatprep.subr.bf16.mxu0 0
      %1321 = vmatpush1.bf16.msra.mxu0 0
      %1322 = vmatprep.subr.bf16.mxu0 0
      %1323 = vmatpush1.bf16.msra.mxu0 0
      %1324 = vmatprep.subr.bf16.mxu0 0
      %1325 = vmatpush1.bf16.msra.mxu0 0
      %1326 = vmatprep.subr.bf16.mxu0 0
      %1327 = vmatpush1.bf16.msra.mxu0 0
      %1328 = vmatprep.subr.bf16.mxu0 0
      %1329 = vmatpush1.bf16.msra.mxu0 0
      %1330 = vmatprep.subr.bf16.mxu0 0
      %1331 = vmatpush1.bf16.msra.mxu0 0
      %1332 = vmatprep.subr.bf16.mxu0 0
      %1333 = vmatpush1.bf16.msra.mxu0 0
      %1334 = vmatprep.subr.bf16.mxu0 0
      %1335 = vmatpush1.bf16.msra.mxu0 0
      %1336 = vmatprep.subr.bf16.mxu0 0
      %1337 = vmatpush1.bf16.msra.mxu0 0
      %1338 = vmatprep.subr.bf16.mxu0 0
      %1339 = vmatpush1.bf16.msra.mxu0 0
      %1340 = vmatprep.subr.bf16.mxu0 0
      %1341 = vmatpush1.bf16.msra.mxu0 0
      %1342 = vmatprep.subr.bf16.mxu0 0
      %1343 = vmatpush1.bf16.msra.mxu0 0
      %1344 = vmatprep.subr.bf16.mxu0 0
      %1345 = vmatpush1.bf16.msra.mxu0 0
      %1346 = vmatprep.subr.bf16.mxu0 0
      %1347 = vmatpush1.bf16.msra.mxu0 0
      %1348 = vmatprep.mubr.bf16.mxu0 0
      %1349 = vmatmul.mubr.bf16.gmra.mrb[0].mxu0 %v1314
      %v1350 = vpop.f32.mrb[0].mxu0
      %v1351 = vadd.f32 0.0, %v1350
      %v1352 = vpop.f32.mrb[0].mxu0
      %v1353 = vpop.f32.mrb[0].mxu0
      %v1354 = vpop.f32.mrb[0].mxu0
      %1355 = vdwg.mxu0
      %v1356 = vadd.f32 %v1304, %v1351
      %s1357 = scalar_lea.vmem %s9, 24
      %v1358 = vld [vmem:[%s1357] sm:$0xf]
      %1359 = vrot.lane.b32.xlu0 %v993, 114
      %v1360 = vpop.permute.xlu0 %1359
      %1361 = vrot.lane.b32.xlu0 %v994, 114
      %v1362 = vpop.permute.xlu0 %1361
      %v1366 = vsel %vm576, %v1358, 0
      %1368 = vmatprep.subr.bf16.mxu0 0
      %1369 = vmatpush1.bf16.msra.mxu0 %v1360
      %1370 = vmatprep.subr.bf16.mxu0 0
      %1371 = vmatpush1.bf16.msra.mxu0 %v1362
      %1372 = vmatprep.subr.bf16.mxu0 0
      %1373 = vmatpush1.bf16.msra.mxu0 0
      %1374 = vmatprep.subr.bf16.mxu0 0
      %1375 = vmatpush1.bf16.msra.mxu0 0
      %1376 = vmatprep.subr.bf16.mxu0 0
      %1377 = vmatpush1.bf16.msra.mxu0 0
      %1378 = vmatprep.subr.bf16.mxu0 0
      %1379 = vmatpush1.bf16.msra.mxu0 0
      %1380 = vmatprep.subr.bf16.mxu0 0
      %1381 = vmatpush1.bf16.msra.mxu0 0
      %1382 = vmatprep.subr.bf16.mxu0 0
      %1383 = vmatpush1.bf16.msra.mxu0 0
      %1384 = vmatprep.subr.bf16.mxu0 0
      %1385 = vmatpush1.bf16.msra.mxu0 0
      %1386 = vmatprep.subr.bf16.mxu0 0
      %1387 = vmatpush1.bf16.msra.mxu0 0
      %1388 = vmatprep.subr.bf16.mxu0 0
      %1389 = vmatpush1.bf16.msra.mxu0 0
      %1390 = vmatprep.subr.bf16.mxu0 0
      %1391 = vmatpush1.bf16.msra.mxu0 0
      %1392 = vmatprep.subr.bf16.mxu0 0
      %1393 = vmatpush1.bf16.msra.mxu0 0
      %1394 = vmatprep.subr.bf16.mxu0 0
      %1395 = vmatpush1.bf16.msra.mxu0 0
      %1396 = vmatprep.subr.bf16.mxu0 0
      %1397 = vmatpush1.bf16.msra.mxu0 0
      %1398 = vmatprep.subr.bf16.mxu0 0
      %1399 = vmatpush1.bf16.msra.mxu0 0
      %1400 = vmatprep.mubr.bf16.mxu0 0
      %1401 = vmatmul.mubr.bf16.gmra.mrb[0].mxu0 %v1366
      %v1402 = vpop.f32.mrb[0].mxu0
      %v1403 = vadd.f32 0.0, %v1402
      %v1404 = vpop.f32.mrb[0].mxu0
      %v1405 = vpop.f32.mrb[0].mxu0
      %v1406 = vpop.f32.mrb[0].mxu0
      %1407 = vdwg.mxu0
      %v1408 = vadd.f32 %v1356, %v1403
      %s1409 = scalar_lea.vmem %s9, 28
      %v1410 = vld [vmem:[%s1409] sm:$0xf]
      %1411 = vrot.lane.b32.xlu0 %v993, 113
      %v1412 = vpop.permute.xlu0 %1411
      %1413 = vrot.lane.b32.xlu0 %v994, 113
      %v1414 = vpop.permute.xlu0 %1413
      %v1418 = vsel %vm576, %v1410, 0
      %1420 = vmatprep.subr.bf16.mxu0 0
      %1421 = vmatpush1.bf16.msra.mxu0 %v1412
      %1422 = vmatprep.subr.bf16.mxu0 0
      %1423 = vmatpush1.bf16.msra.mxu0 %v1414
      %1424 = vmatprep.subr.bf16.mxu0 0
      %1425 = vmatpush1.bf16.msra.mxu0 0
      %1426 = vmatprep.subr.bf16.mxu0 0
      %1427 = vmatpush1.bf16.msra.mxu0 0
      %1428 = vmatprep.subr.bf16.mxu0 0
      %1429 = vmatpush1.bf16.msra.mxu0 0
      %1430 = vmatprep.subr.bf16.mxu0 0
      %1431 = vmatpush1.bf16.msra.mxu0 0
      %1432 = vmatprep.subr.bf16.mxu0 0
      %1433 = vmatpush1.bf16.msra.mxu0 0
      %1434 = vmatprep.subr.bf16.mxu0 0
      %1435 = vmatpush1.bf16.msra.mxu0 0
      %1436 = vmatprep.subr.bf16.mxu0 0
      %1437 = vmatpush1.bf16.msra.mxu0 0
      %1438 = vmatprep.subr.bf16.mxu0 0
      %1439 = vmatpush1.bf16.msra.mxu0 0
      %1440 = vmatprep.subr.bf16.mxu0 0
      %1441 = vmatpush1.bf16.msra.mxu0 0
      %1442 = vmatprep.subr.bf16.mxu0 0
      %1443 = vmatpush1.bf16.msra.mxu0 0
      %1444 = vmatprep.subr.bf16.mxu0 0
      %1445 = vmatpush1.bf16.msra.mxu0 0
      %1446 = vmatprep.subr.bf16.mxu0 0
      %1447 = vmatpush1.bf16.msra.mxu0 0
      %1448 = vmatprep.subr.bf16.mxu0 0
      %1449 = vmatpush1.bf16.msra.mxu0 0
      %1450 = vmatprep.subr.bf16.mxu0 0
      %1451 = vmatpush1.bf16.msra.mxu0 0
      %1452 = vmatprep.mubr.bf16.mxu0 0
      %1453 = vmatmul.mubr.bf16.gmra.mrb[0].mxu0 %v1418
      %v1454 = vpop.f32.mrb[0].mxu0
      %v1455 = vadd.f32 0.0, %v1454
      %v1456 = vpop.f32.mrb[0].mxu0
      %v1457 = vpop.f32.mrb[0].mxu0
      %v1458 = vpop.f32.mrb[0].mxu0
      %1459 = vdwg.mxu0
      %v1460 = vadd.f32 %v1408, %v1455
      %s1461 = scalar_lea.vmem %s9, 32
      %v1462 = vld [vmem:[%s1461] sm:$0xf]
      %1463 = vrot.lane.b32.xlu0 %v993, 112
      %v1464 = vpop.permute.xlu0 %1463
      %1465 = vrot.lane.b32.xlu0 %v994, 112
      %v1466 = vpop.permute.xlu0 %1465
      %v1470 = vsel %vm576, %v1462, 0
      %1472 = vmatprep.subr.bf16.mxu0 0
      %1473 = vmatpush1.bf16.msra.mxu0 %v1464
      %1474 = vmatprep.subr.bf16.mxu0 0
      %1475 = vmatpush1.bf16.msra.mxu0 %v1466
      %1476 = vmatprep.subr.bf16.mxu0 0
      %1477 = vmatpush1.bf16.msra.mxu0 0
      %1478 = vmatprep.subr.bf16.mxu0 0
      %1479 = vmatpush1.bf16.msra.mxu0 0
      %1480 = vmatprep.subr.bf16.mxu0 0
      %1481 = vmatpush1.bf16.msra.mxu0 0
      %1482 = vmatprep.subr.bf16.mxu0 0
      %1483 = vmatpush1.bf16.msra.mxu0 0
      %1484 = vmatprep.subr.bf16.mxu0 0
      %1485 = vmatpush1.bf16.msra.mxu0 0
      %1486 = vmatprep.subr.bf16.mxu0 0
      %1487 = vmatpush1.bf16.msra.mxu0 0
      %1488 = vmatprep.subr.bf16.mxu0 0
      %1489 = vmatpush1.bf16.msra.mxu0 0
      %1490 = vmatprep.subr.bf16.mxu0 0
      %1491 = vmatpush1.bf16.msra.mxu0 0
      %1492 = vmatprep.subr.bf16.mxu0 0
      %1493 = vmatpush1.bf16.msra.mxu0 0
      %1494 = vmatprep.subr.bf16.mxu0 0
      %1495 = vmatpush1.bf16.msra.mxu0 0
      %1496 = vmatprep.subr.bf16.mxu0 0
      %1497 = vmatpush1.bf16.msra.mxu0 0
      %1498 = vmatprep.subr.bf16.mxu0 0
      %1499 = vmatpush1.bf16.msra.mxu0 0
      %1500 = vmatprep.subr.bf16.mxu0 0
      %1501 = vmatpush1.bf16.msra.mxu0 0
      %1502 = vmatprep.subr.bf16.mxu0 0
      %1503 = vmatpush1.bf16.msra.mxu0 0
      %1504 = vmatprep.mubr.bf16.mxu0 0
      %1505 = vmatmul.mubr.bf16.gmra.mrb[0].mxu0 %v1470
      %v1506 = vpop.f32.mrb[0].mxu0
      %v1507 = vadd.f32 0.0, %v1506
      %v1508 = vpop.f32.mrb[0].mxu0
      %v1509 = vpop.f32.mrb[0].mxu0
      %v1510 = vpop.f32.mrb[0].mxu0
      %1511 = vdwg.mxu0
      %v1512 = vadd.f32 %v1460, %v1507
      %v1513 = vld [vmem:[%s10] sm:$0xff]
      %1515 = vset.pattern.permute.xlu0 0
      %1516 = vperm.xlu0 %1515, %v1513
      %v1517 = vpop.permute.xlu0 %1516
      %v1519 = vadd.f32 %v1512, %v1517
      %vm1520 = vcmask 850944
      %1521 = vst.msk [vmem:[%s506] sm:$0xff] %vm1520, %v1519
      %v1522 = vld [vmem:[%s12] sm:$0xf]
      %v1524 = vsel %vm576, %v1522, 0
      %1526 = vmatprep.subr.bf16.mxu0 0
      %1527 = vmatpush1.bf16.msra.mxu0 %v1001
      %1528 = vmatprep.subr.bf16.mxu0 0
      %1529 = vmatpush1.bf16.msra.mxu0 %v1003
      %1530 = vmatprep.subr.bf16.mxu0 0
      %1531 = vmatpush1.bf16.msra.mxu0 0
      %1532 = vmatprep.subr.bf16.mxu0 0
      %1533 = vmatpush1.bf16.msra.mxu0 0
      %1534 = vmatprep.subr.bf16.mxu0 0
      %1535 = vmatpush1.bf16.msra.mxu0 0
      %1536 = vmatprep.subr.bf16.mxu0 0
      %1537 = vmatpush1.bf16.msra.mxu0 0
      %1538 = vmatprep.subr.bf16.mxu0 0
      %1539 = vmatpush1.bf16.msra.mxu0 0
      %1540 = vmatprep.subr.bf16.mxu0 0
      %1541 = vmatpush1.bf16.msra.mxu0 0
      %1542 = vmatprep.subr.bf16.mxu0 0
      %1543 = vmatpush1.bf16.msra.mxu0 0
      %1544 = vmatprep.subr.bf16.mxu0 0
      %1545 = vmatpush1.bf16.msra.mxu0 0
      %1546 = vmatprep.subr.bf16.mxu0 0
      %1547 = vmatpush1.bf16.msra.mxu0 0
      %1548 = vmatprep.subr.bf16.mxu0 0
      %1549 = vmatpush1.bf16.msra.mxu0 0
      %1550 = vmatprep.subr.bf16.mxu0 0
      %1551 = vmatpush1.bf16.msra.mxu0 0
      %1552 = vmatprep.subr.bf16.mxu0 0
      %1553 = vmatpush1.bf16.msra.mxu0 0
      %1554 = vmatprep.subr.bf16.mxu0 0
      %1555 = vmatpush1.bf16.msra.mxu0 0
      %1556 = vmatprep.subr.bf16.mxu0 0
      %1557 = vmatpush1.bf16.msra.mxu0 0
      %1558 = vmatprep.mubr.bf16.mxu0 0
      %1559 = vmatmul.mubr.bf16.gmra.mrb[0].mxu0 %v1524
      %v1560 = vpop.f32.mrb[0].mxu0
      %v1561 = vadd.f32 0.0, %v1560
      %v1562 = vpop.f32.mrb[0].mxu0
      %v1563 = vpop.f32.mrb[0].mxu0
      %v1564 = vpop.f32.mrb[0].mxu0
      %1565 = vdwg.mxu0
      %vm1566 = vcmask 916480
      %v1567 = vsel %vm1566, %v1561, 0.0
      %1568 = vadd.xlane.f32.xlu0 %v1567
      %v1569 = vpop.xlane.xlu0 %1568
      %v1570 = vmul.f32 %v1569, 0.008928572
      %v1571 = vld [vmem:[%s502] sm:$0xff]
      %v1572 = vadd.f32 %v1570, %v1571
      %vm1573 = vcmask 7168
      %1574 = vst.msk [vmem:[%s510] sm:$0xff] %vm1573, %v1572
      %p1575 = scmp.lt.s32.totalorder %s26, 1
      %s1576 = scalar_select %p1575, %s26, 1
      %s1577 = smul.addr %s1576, 8
      %s1578 = scalar_lea.vmem %s13, %s1577
      %p1579 = scmp.lt.s32.totalorder %s26, 1
      %s1580 = scalar_select %p1579, %s26, 1
      %s1581 = smul.addr %s1580, 8
      %s1582 = scalar_lea.vmem %s14, %s1581
      // Predicated region
      $region73: #{_lambda_.1} parent=71 // pred_check
        %p1583 = pneg %p332
      $region74: #{_lambda_.1} parent=71 // pred_check_branch
        %1585 = sbr.rel (%p1583) target = $region76
      $region75: #{_lambda_.1} parent=71 // pred_region
        _
      $region76: #{_lambda_.1} parent=71 // pred_fallthru
        _
      // Predicated region
      $region77: #{_lambda_.1} parent=71 // pred_check
        %p1586 = pneg %p358
      $region78: #{_lambda_.1} parent=71 // pred_check_branch
        %1588 = sbr.rel (%p1586) target = $region80
      $region79: #{_lambda_.1} parent=71 // pred_region
        _
      $region80: #{_lambda_.1} parent=71 // pred_fallthru
        _
    $region72: #{_lambda_.1} parent=5 // pred_fallthru
      _
    %p1589 = scmp.le.s32.totalorder 2, %s21
    // Predicated region
    $region81: #{_lambda_.1} parent=5 // pred_check
      %p1590 = pneg %p1589
    $region82: #{_lambda_.1} parent=5 // pred_check_branch
      %1592 = sbr.rel (%p1590) target = $region84
    $region83: #{_lambda_.1} parent=5 // pred_region
      %s1593 = ssub.s32 %s21, 2
      // Predicated region
      $region85: #{_lambda_.1} parent=83 // pred_check
        %p1594 = pneg %p338
      $region86: #{_lambda_.1} parent=83 // pred_check_branch
        %1596 = sbr.rel (%p1594) target = $region88
      $region87: #{_lambda_.1} parent=83 // pred_region
        %p1597 = scmp.lt.s32.totalorder %s27, 1
        %s1598 = scalar_select %p1597, %s27, 1
        %s1599 = smul.addr %s1598, 8
        %s1600 = scalar_lea.vmem %s13, %s1599
      $region88: #{_lambda_.1} parent=83 // pred_fallthru
        _
      // Predicated region
      $region89: #{_lambda_.1} parent=83 // pred_check
        %p1601 = pneg %p364
      $region90: #{_lambda_.1} parent=83 // pred_check_branch
        %1603 = sbr.rel (%p1601) target = $region92
      $region91: #{_lambda_.1} parent=83 // pred_region
        %p1604 = scmp.lt.s32.totalorder %s27, 1
        %s1605 = scalar_select %p1604, %s27, 1
        %s1606 = smul.addr %s1605, 8
        %s1607 = scalar_lea.vmem %s14, %s1606
      $region92: #{_lambda_.1} parent=83 // pred_fallthru
        _
    $region84: #{_lambda_.1} parent=5 // pred_fallthru
      _
  $region6: #{_lambda_.1} parent=0 // loop_footer
    %s25 = sadd.s32 1, %s21
  $region7: #{_lambda_.1} parent=0 // loop_footer_branch
    %20 = sbr.rel target = $region3
  $region8: #{_lambda_.1} parent=0 // loop_exit
    _

</llo_original>
